<compile_context>
chip_gen: v6e
topology: v6e:2x2x1
jax: 0.10.0
libtpu: 0.0.40
codegen_flags: <defaults>
</compile_context>

<pallas_src>
import functools

import jax
import jax.numpy as jnp
from jax.experimental import pallas as pl
from jax.experimental.pallas import tpu as pltpu

_NEG_INF = -1e30


def _round_up(x, m):
    return (x + m - 1) // m * m


def _bf16_eup_ok():
    """bf16 EUP exp is profitable on v6e/v7x; keep f32 on v5e and older."""
    try:
        kind = jax.devices()[0].device_kind.lower()
    except Exception:
        return False
    return any(tag in kind for tag in ("v6", "v7", "tpu7"))


def _choose_tiling(s, num_heads):
    """Pick (TQ, TK, S_pad) for the spatial (lane) axis.

    * Small S: one whole-S tile per (batch, q) step -> single-pass softmax,
      minimal grid overhead (fixed ~0.35us/step cost dominates tiny tiles).
    * Large S: TQ=128 with TK capped so the batched fp32 score tile
      (num_heads, TK, TQ) stays near the vreg file (avoids spill traffic;
      v5e has only one vector-store slot per bundle).
    * Indivisible S: pad to a tile multiple; padded kv positions are masked
      in-kernel, padded q rows are sliced off in the wrapper.
    """
    if s <= 256:
        sp = _round_up(s, 128)      # lane-dense blocks / stores
        return sp, sp, sp
    tq = 128
    tk = 256 if num_heads <= 4 else 128
    if s % tk == 0:
        return tq, tk, s
    if s % tq == 0:
        return tq, tq, s
    return tq, tk, _round_up(s, max(tq, tk))


def _spatial_mha_kernel(xq_ref, xkv_ref, wq_ref, bq_ref, wkv_ref, bkv_ref,
                        wf_ref, bf_ref, o_ref, *scratch,
                        num_heads, d_k, s_actual, s_pad, tk, exp_dtype,
                        single_pass):
    """Channels-first flash attention.  Grid = (batch, q_tile, kv_tile).

    Blocks (spatial axis on lanes):
      xq_ref : (1, C, TQ)  bf16   q-tile of x
      xkv_ref: (1, C, TK)  bf16   kv-tile of x
      wq_ref : (HD, C)     bf16   Wq^T, pre-scaled by 1/sqrt(d_k)
      bq_ref : (HD, 1)     f32    (pre-scaled)
      wkv_ref: (2*HD, C)   bf16   [Wk^T ; Wv^T]
      bkv_ref: (2*HD, 1)   f32
      wf_ref : (C, HD)     bf16   output projection (transposed)
      bf_ref : (C, 1)      f32
      o_ref  : (1, C, TQ)         output block, lane-dense along TQ
    Scratch (only when nk > 1):
      q_ref  : (H, d_k, TQ) bf16  cached Q tile
      m_ref  : (H, 1, TQ)   f32   running softmax max
      l_ref  : (H, 1, TQ)   f32   running softmax sum
      acc_ref: (H, d_k, TQ) f32   running PV accumulator
    """
    HD = num_heads * d_k
    TQ = o_ref.shape[2]
    TK = xkv_ref.shape[2]

    def project_q():
        # (HD, C) @ (C, TQ) -> (HD, TQ) -> (H, d_k, TQ)   (head-major split)
        q = jnp.dot(wq_ref[...], xq_ref[0],
                    preferred_element_type=jnp.float32) + bq_ref[...]
        return q.astype(jnp.bfloat16).reshape(num_heads, d_k, TQ)

    def project_kv():
        # fused K/V projection: (2HD, C) @ (C, TK) -> (2HD, TK)
        kv = jnp.dot(wkv_ref[...], xkv_ref[0],
                     preferred_element_type=jnp.float32) + bkv_ref[...]
        kv = kv.astype(jnp.bfloat16)
        k3 = kv[:HD].reshape(num_heads, d_k, TK)
        v3 = kv[HD:].reshape(num_heads, d_k, TK)
        return k3, v3

    def scores(q3, k3, kv_start):
        # batched QK^T over heads: (H, d_k, TK) x (H, d_k, TQ) -> (H, TK, TQ)
        s = jax.lax.dot_general(k3, q3, (((1,), (1,)), ((0,), (0,))),
                                preferred_element_type=jnp.float32)
        if s_actual != s_pad:   # static check: mask padded kv positions only
            kv_idx = jax.lax.broadcasted_iota(jnp.int32, s.shape, 1)
            s = jnp.where(kv_idx < (s_actual - kv_start), s, _NEG_INF)
        return s

    def pv_matmul(v3, p):
        # batched PV: (H, d_k, TK) x (H, TK, TQ) -> (H, d_k, TQ)
        return jax.lax.dot_general(v3, p.astype(jnp.bfloat16),
                                   (((2,), (1,)), ((0,), (0,))),
                                   preferred_element_type=jnp.float32)

    def project_out(o3):
        # fold heads back: (H, d_k, TQ) -> (HD, TQ); (C, HD) @ (HD, TQ) -> (C, TQ)
        y = jnp.dot(wf_ref[...], o3.reshape(HD, TQ),
                    preferred_element_type=jnp.float32) + bf_ref[...]
        o_ref[0] = y.astype(o_ref.dtype)

    if single_pass:
        # ---- nk == 1 fast path: plain softmax, no online-softmax machinery.
        q3 = project_q()
        k3, v3 = project_kv()
        s = scores(q3, k3, 0)                                   # (H, TK, TQ)
        m = jnp.max(s, axis=1, keepdims=True)                   # (H, 1, TQ)
        p = jnp.exp((s - m).astype(exp_dtype))                  # EUP
        l = jnp.sum(p.astype(jnp.float32), axis=1, keepdims=True)
        pv = pv_matmul(v3, p)                                   # (H, d_k, TQ)
        project_out((pv * pl.reciprocal(l, approx=True)).astype(jnp.bfloat16))
        return

    # ---- general path: online softmax over kv tiles.
    q_ref, m_ref, l_ref, acc_ref = scratch
    ki = pl.program_id(2)
    nk = pl.num_programs(2)

    @pl.when(ki == 0)
    def _():
        q_ref[...] = project_q()
        m_ref[...] = jnp.full(m_ref.shape, _NEG_INF, jnp.float32)
        l_ref[...] = jnp.zeros(l_ref.shape, jnp.float32)
        acc_ref[...] = jnp.zeros(acc_ref.shape, jnp.float32)

    k3, v3 = project_kv()
    s = scores(q_ref[...], k3, ki * tk)                         # (H, TK, TQ)

    m_prev = m_ref[...]
    m_new = jnp.maximum(m_prev, jnp.max(s, axis=1, keepdims=True))
    alpha = jnp.exp(m_prev - m_new)                             # (H, 1, TQ) f32
    p = jnp.exp((s - m_new).astype(exp_dtype))

    l_ref[...] = alpha * l_ref[...] + jnp.sum(p.astype(jnp.float32),
                                              axis=1, keepdims=True)
    acc_ref[...] = alpha * acc_ref[...] + pv_matmul(v3, p)
    m_ref[...] = m_new

    @pl.when(ki == nk - 1)
    def _():
        inv_l = pl.reciprocal(l_ref[...], approx=True)          # EUP slot
        project_out((acc_ref[...] * inv_l).astype(jnp.bfloat16))


def spatial_mha_pallas(x_nchw, params, *, num_heads, d_k,
                       out_dtype=jnp.bfloat16):
    B, C, H, W = x_nchw.shape
    S = H * W
    HD = num_heads * d_k
    wq, bq, wk, bk, wv, bv, wf, bf = params

    # Fold 1/sqrt(d_k) into the Q projection; fuse K & V; transpose weights
    # once so that projections run as W^T (out, C) @ x (C, tile).
    scale = 1.0 / (d_k ** 0.5)
    wq_t = (wq.T * scale).astype(jnp.bfloat16)                       # (HD, C)
    bq_c = (bq.reshape(HD, 1) * scale).astype(jnp.float32)           # (HD, 1)
    wkv_t = jnp.concatenate([wk.T, wv.T], axis=0).astype(jnp.bfloat16)  # (2HD, C)
    bkv_c = jnp.concatenate([bk, bv], axis=1).reshape(2 * HD, 1).astype(jnp.float32)
    wf_t = wf.T.astype(jnp.bfloat16)                                  # (C, HD)
    bf_c = bf.reshape(C, 1).astype(jnp.float32)                       # (C, 1)

    TQ, TK, S_pad = _choose_tiling(S, num_heads)
    nq, nk = S_pad // TQ, S_pad // TK
    single_pass = (nk == 1)

    # NCHW -> (B, C, S): a pure reshape, no transpose (channels-first layout
    # is kept end-to-end; the spatial axis is the lane axis of every block).
    x = x_nchw.reshape(B, C, S).astype(jnp.bfloat16)
    if S_pad != S:
        x = jnp.pad(x, ((0, 0), (0, 0), (0, S_pad - S)))

    exp_dtype = jnp.bfloat16 if _bf16_eup_ok() else jnp.float32

    kernel = functools.partial(
        _spatial_mha_kernel, num_heads=num_heads, d_k=d_k, s_actual=S,
        s_pad=S_pad, tk=TK, exp_dtype=exp_dtype, single_pass=single_pass)

    scratch = []
    if not single_pass:
        scratch = [
            pltpu.VMEM((num_heads, d_k, TQ), jnp.bfloat16),   # cached Q tile
            pltpu.VMEM((num_heads, 1, TQ), jnp.float32),      # running max m
            pltpu.VMEM((num_heads, 1, TQ), jnp.float32),      # running sum l
            pltpu.VMEM((num_heads, d_k, TQ), jnp.float32),    # PV accumulator
        ]

    flops = int(B * (2 * S * C * 3 * HD            # Q/K/V projections
                     + 4 * S * S * HD              # QK^T and PV over all heads
                     + 2 * S * HD * C))            # output projection
    transcendentals = int(B * num_heads * S * S)   # softmax exp
    bytes_accessed = int(2 * 2 * B * S_pad * C                       # x (bf16) x2 paths
                         + B * S_pad * C * jnp.dtype(out_dtype).itemsize
                         + 2 * (3 * C * HD + HD * C) + 4 * (3 * HD + C))

    out = pl.pallas_call(
        kernel,
        out_shape=jax.ShapeDtypeStruct((B, C, S_pad), out_dtype),
        grid_spec=pltpu.PrefetchScalarGridSpec(
            num_scalar_prefetch=0,
            grid=(B, nq, nk),
            in_specs=[
                pl.BlockSpec((1, C, TQ), lambda b, qi, ki: (b, 0, qi)),   # x q-tile
                pl.BlockSpec((1, C, TK), lambda b, qi, ki: (b, 0, ki)),   # x kv-tile
                pl.BlockSpec((HD, C), lambda b, qi, ki: (0, 0)),          # Wq^T (scaled)
                pl.BlockSpec((HD, 1), lambda b, qi, ki: (0, 0)),          # bq (scaled)
                pl.BlockSpec((2 * HD, C), lambda b, qi, ki: (0, 0)),      # [Wk^T; Wv^T]
                pl.BlockSpec((2 * HD, 1), lambda b, qi, ki: (0, 0)),      # [bk; bv]
                pl.BlockSpec((C, HD), lambda b, qi, ki: (0, 0)),          # Wfc^T
                pl.BlockSpec((C, 1), lambda b, qi, ki: (0, 0)),           # bfc
            ],
            out_specs=pl.BlockSpec((1, C, TQ), lambda b, qi, ki: (b, 0, qi)),
            scratch_shapes=scratch,
        ),
        compiler_params=pltpu.CompilerParams(
            dimension_semantics=("parallel", "parallel", "arbitrary"),
            vmem_limit_bytes=32 * 1024 * 1024,   # far below need; explicit budget
        ),
        cost_estimate=pl.CostEstimate(
            flops=flops,
            transcendentals=transcendentals,
            bytes_accessed=bytes_accessed),
    )(x, x, wq_t, bq_c, wkv_t, bkv_c, wf_t, bf_c)

    if S_pad != S:
        out = out[:, :, :S]
    return out.reshape(B, C, H, W)


def spatial_mha_reference(x_nchw, params, *, num_heads, d_k):
    """Pure-JAX fp32 reference mirroring the PyTorch forward pass."""
    B, C, H, W = x_nchw.shape
    S = H * W
    wq, bq, wk, bk, wv, bv, wf, bf = params
    x = jnp.transpose(x_nchw.reshape(B, C, S), (0, 2, 1))          # (B, S, C)
    q = x @ wq + bq
    k = x @ wk + bk
    v = x @ wv + bv

    def split(t):  # (B, S, nh*dk) -> (B, nh, S, dk); channel = h*d_k + d
        return jnp.transpose(t.reshape(B, S, num_heads, d_k), (0, 2, 1, 3))

    q, k, v = split(q), split(k), split(v)
    scores = jnp.einsum('bhqd,bhkd->bhqk', q, k) / (d_k ** 0.5)
    attn = jax.nn.softmax(scores, axis=-1)
    o = jnp.einsum('bhqk,bhkd->bhqd', attn, v)                     # (B, nh, S, dk)
    o = jnp.transpose(o, (0, 2, 1, 3)).reshape(B, S, num_heads * d_k)
    y = o @ wf + bf                                                # (B, S, C)
    return jnp.transpose(y, (0, 2, 1)).reshape(B, C, H, W)


def init_params(key, in_channels, num_heads, d_k):
    """Deterministic synthetic parameters (Conv2d 1x1 == dense over channels)."""
    HD = num_heads * d_k
    ks = jax.random.split(key, 8)
    scale_in = 1.0 / (in_channels ** 0.5)
    scale_hd = 1.0 / (HD ** 0.5)
    wq = jax.random.normal(ks[0], (in_channels, HD), jnp.float32) * scale_in
    bq = jax.random.normal(ks[1], (1, HD), jnp.float32) * 0.1
    wk = jax.random.normal(ks[2], (in_channels, HD), jnp.float32) * scale_in
    bk = jax.random.normal(ks[3], (1, HD), jnp.float32) * 0.1
    wv = jax.random.normal(ks[4], (in_channels, HD), jnp.float32) * scale_in
    bv = jax.random.normal(ks[5], (1, HD), jnp.float32) * 0.1
    wf = jax.random.normal(ks[6], (HD, in_channels), jnp.float32) * scale_hd
    bf = jax.random.normal(ks[7], (1, in_channels), jnp.float32) * 0.1
    return (wq, bq, wk, bk, wv, bv, wf, bf)


if __name__ == "__main__":
    B, C, H, W = 2, 4, 16, 16
    num_heads, d_k = 2, 8

    key = jax.random.PRNGKey(0)
    k_x, k_p = jax.random.split(key)
    x = jax.random.normal(k_x, (B, C, H, W), jnp.float32)
    params = init_params(k_p, C, num_heads, d_k)

    out = spatial_mha_pallas(x, params, num_heads=num_heads, d_k=d_k)
    out = jax.block_until_ready(out)

    ref = spatial_mha_reference(x, params, num_heads=num_heads, d_k=d_k)
    assert out.shape == (B, C, H, W)
    # bf16 MXU operands / bf16 output / approx reciprocal -> relaxed tolerance
    # vs the fp32 reference (softmax stats and accumulators stay fp32).
    assert jnp.allclose(out.astype(jnp.float32), ref, atol=5e-2, rtol=5e-2), \
        "mismatch vs JAX reference"

    print("KERNEL_OK")
</pallas_src>

<mosaic_0001>
module attributes {stable_mosaic.version = 11 : i64} {
  func.func @_spatial_mha_kernel(%arg0: i32, %arg1: i32, %arg2: i32, %arg3: memref<1x4x256xbf16, #tpu.memory_space<vmem>>, %arg4: memref<1x4x256xbf16, #tpu.memory_space<vmem>>, %arg5: memref<16x4xbf16, #tpu.memory_space<vmem>>, %arg6: memref<16x1xf32, #tpu.memory_space<vmem>>, %arg7: memref<32x4xbf16, #tpu.memory_space<vmem>>, %arg8: memref<32x1xf32, #tpu.memory_space<vmem>>, %arg9: memref<4x16xbf16, #tpu.memory_space<vmem>>, %arg10: memref<4x1xf32, #tpu.memory_space<vmem>>, %arg11: memref<1x4x256xbf16, #tpu.memory_space<vmem>>) attributes {dimension_semantics = [#tpu.dimension_semantics<parallel>, #tpu.dimension_semantics<parallel>, #tpu.dimension_semantics<arbitrary>], iteration_bounds = array<i64: 2, 1, 1>, scalar_prefetch = 0 : i64, scratch_operands = 0 : i64, tpu.core_type = #tpu.core_type<tc>, window_params = [{transform_indices = @transform_0, window_bounds = array<i64: 1, 4, 256>}, {transform_indices = @transform_1, window_bounds = array<i64: 1, 4, 256>}, {pipeline_mode = #tpu.pipeline_mode<synchronous>, transform_indices = @transform_2, window_bounds = array<i64: 16, 4>}, {pipeline_mode = #tpu.pipeline_mode<synchronous>, transform_indices = @transform_3, window_bounds = array<i64: 16, 1>}, {pipeline_mode = #tpu.pipeline_mode<synchronous>, transform_indices = @transform_4, window_bounds = array<i64: 32, 4>}, {pipeline_mode = #tpu.pipeline_mode<synchronous>, transform_indices = @transform_5, window_bounds = array<i64: 32, 1>}, {pipeline_mode = #tpu.pipeline_mode<synchronous>, transform_indices = @transform_6, window_bounds = array<i64: 4, 16>}, {pipeline_mode = #tpu.pipeline_mode<synchronous>, transform_indices = @transform_7, window_bounds = array<i64: 4, 1>}, {transform_indices = @transform_8, window_bounds = array<i64: 1, 4, 256>}]} {
    %c0 = arith.constant 0 : index
    %c0_0 = arith.constant 0 : index
    %0 = vector.load %arg5[%c0, %c0_0] : memref<16x4xbf16, #tpu.memory_space<vmem>>, vector<16x4xbf16>
    %c0_1 = arith.constant 0 : index
    %c0_2 = arith.constant 0 : index
    %c0_3 = arith.constant 0 : index
    %1 = vector.load %arg3[%c0_1, %c0_2, %c0_3] : memref<1x4x256xbf16, #tpu.memory_space<vmem>>, vector<1x4x256xbf16>
    %2 = vector.shape_cast %1 : vector<1x4x256xbf16> to vector<4x256xbf16>
    %cst = arith.constant dense<0.000000e+00> : vector<16x256xf32>
    %3 = tpu.matmul %0, %2, %cst {dimension_numbers = #tpu.dot_dimension_numbers<[1], [0], [0], [1], [0, 0, 1, 1], [], []>} : vector<16x4xbf16>, vector<4x256xbf16>, vector<16x256xf32> -> vector<16x256xf32>
    %c0_4 = arith.constant 0 : index
    %c0_5 = arith.constant 0 : index
    %4 = vector.load %arg6[%c0_4, %c0_5] : memref<16x1xf32, #tpu.memory_space<vmem>>, vector<16x1xf32>
    %5 = vector.broadcast %4 : vector<16x1xf32> to vector<16x256xf32>
    %6 = arith.addf %3, %5 : vector<16x256xf32>
    %7 = arith.truncf %6 : vector<16x256xf32> to vector<16x256xbf16>
    %8 = vector.shape_cast %7 : vector<16x256xbf16> to vector<2x8x256xbf16>
    %c0_6 = arith.constant 0 : index
    %c0_7 = arith.constant 0 : index
    %9 = vector.load %arg7[%c0_6, %c0_7] : memref<32x4xbf16, #tpu.memory_space<vmem>>, vector<32x4xbf16>
    %c0_8 = arith.constant 0 : index
    %c0_9 = arith.constant 0 : index
    %c0_10 = arith.constant 0 : index
    %10 = vector.load %arg4[%c0_8, %c0_9, %c0_10] : memref<1x4x256xbf16, #tpu.memory_space<vmem>>, vector<1x4x256xbf16>
    %11 = vector.shape_cast %10 : vector<1x4x256xbf16> to vector<4x256xbf16>
    %cst_11 = arith.constant dense<0.000000e+00> : vector<32x256xf32>
    %12 = tpu.matmul %9, %11, %cst_11 {dimension_numbers = #tpu.dot_dimension_numbers<[1], [0], [0], [1], [0, 0, 1, 1], [], []>} : vector<32x4xbf16>, vector<4x256xbf16>, vector<32x256xf32> -> vector<32x256xf32>
    %c0_12 = arith.constant 0 : index
    %c0_13 = arith.constant 0 : index
    %13 = vector.load %arg8[%c0_12, %c0_13] : memref<32x1xf32, #tpu.memory_space<vmem>>, vector<32x1xf32>
    %14 = vector.broadcast %13 : vector<32x1xf32> to vector<32x256xf32>
    %15 = arith.addf %12, %14 : vector<32x256xf32>
    %16 = arith.truncf %15 : vector<32x256xf32> to vector<32x256xbf16>
    %17 = vector.extract_strided_slice %16 {offsets = [0, 0], sizes = [16, 256], strides = [1, 1]} : vector<32x256xbf16> to vector<16x256xbf16>
    %18 = vector.shape_cast %17 : vector<16x256xbf16> to vector<2x8x256xbf16>
    %19 = vector.extract_strided_slice %16 {offsets = [16, 0], sizes = [16, 256], strides = [1, 1]} : vector<32x256xbf16> to vector<16x256xbf16>
    %20 = vector.shape_cast %19 : vector<16x256xbf16> to vector<2x8x256xbf16>
    %cst_14 = arith.constant dense<0.000000e+00> : vector<2x256x256xf32>
    %21 = tpu.matmul %18, %8, %cst_14 {dimension_numbers = #tpu.dot_dimension_numbers<[1], [1], [2], [2], [0, 0, 0, 2, 1, 2], [0], [0]>} : vector<2x8x256xbf16>, vector<2x8x256xbf16>, vector<2x256x256xf32> -> vector<2x256x256xf32>
    %cst_15 = arith.constant dense<0xFF800000> : vector<2x256xf32>
    %22 = vector.multi_reduction <maximumf>, %21, %cst_15 [1] : vector<2x256x256xf32> to vector<2x256xf32>
    %23 = vector.shape_cast %22 : vector<2x256xf32> to vector<2x1x256xf32>
    %24 = vector.broadcast %23 : vector<2x1x256xf32> to vector<2x256x256xf32>
    %25 = arith.subf %21, %24 : vector<2x256x256xf32>
    %26 = math.exp %25 : vector<2x256x256xf32>
    %cst_16 = arith.constant dense<0.000000e+00> : vector<2x256xf32>
    %27 = vector.multi_reduction <add>, %26, %cst_16 [1] : vector<2x256x256xf32> to vector<2x256xf32>
    %28 = vector.shape_cast %27 : vector<2x256xf32> to vector<2x1x256xf32>
    %29 = arith.truncf %26 : vector<2x256x256xf32> to vector<2x256x256xbf16>
    %cst_17 = arith.constant dense<0.000000e+00> : vector<2x8x256xf32>
    %30 = tpu.matmul %20, %29, %cst_17 {dimension_numbers = #tpu.dot_dimension_numbers<[2], [1], [1], [2], [0, 0, 0, 1, 1, 2], [0], [0]>} : vector<2x8x256xbf16>, vector<2x256x256xbf16>, vector<2x8x256xf32> -> vector<2x8x256xf32>
    %31 = tpu.reciprocal %28 {approx = true} : vector<2x1x256xf32> -> vector<2x1x256xf32>
    %32 = vector.broadcast %31 : vector<2x1x256xf32> to vector<2x8x256xf32>
    %33 = arith.mulf %30, %32 : vector<2x8x256xf32>
    %34 = arith.truncf %33 : vector<2x8x256xf32> to vector<2x8x256xbf16>
    %c0_18 = arith.constant 0 : index
    %c0_19 = arith.constant 0 : index
    %35 = vector.load %arg9[%c0_18, %c0_19] : memref<4x16xbf16, #tpu.memory_space<vmem>>, vector<4x16xbf16>
    %36 = vector.shape_cast %34 : vector<2x8x256xbf16> to vector<16x256xbf16>
    %cst_20 = arith.constant dense<0.000000e+00> : vector<4x256xf32>
    %37 = tpu.matmul %35, %36, %cst_20 {dimension_numbers = #tpu.dot_dimension_numbers<[1], [0], [0], [1], [0, 0, 1, 1], [], []>} : vector<4x16xbf16>, vector<16x256xbf16>, vector<4x256xf32> -> vector<4x256xf32>
    %c0_21 = arith.constant 0 : index
    %c0_22 = arith.constant 0 : index
    %38 = vector.load %arg10[%c0_21, %c0_22] : memref<4x1xf32, #tpu.memory_space<vmem>>, vector<4x1xf32>
    %39 = vector.broadcast %38 : vector<4x1xf32> to vector<4x256xf32>
    %40 = arith.addf %37, %39 : vector<4x256xf32>
    %41 = arith.truncf %40 : vector<4x256xf32> to vector<4x256xbf16>
    %c0_23 = arith.constant 0 : index
    %c0_24 = arith.constant 0 : index
    %c0_25 = arith.constant 0 : index
    %42 = vector.load %arg11[%c0_23, %c0_24, %c0_25] : memref<1x4x256xbf16, #tpu.memory_space<vmem>>, vector<1x4x256xbf16>
    %43 = vector.shape_cast %42 : vector<1x4x256xbf16> to vector<4x256xbf16>
    %44 = vector.shape_cast %41 : vector<4x256xbf16> to vector<1x4x256xbf16>
    tpu.vector_store %arg11[%c0_23, %c0_24, %c0_25], %44 {strides = array<i32>} : memref<1x4x256xbf16, #tpu.memory_space<vmem>>, vector<1x4x256xbf16>,
    return
  }
  func.func @transform_0(%arg0: i32, %arg1: i32, %arg2: i32) -> (i32, i32, i32) {
    %c0_i32 = arith.constant 0 : i32
    %c0_i32_0 = arith.constant 0 : i32
    return %arg0, %c0_i32, %arg1 : i32, i32, i32
  }
  func.func @transform_1(%arg0: i32, %arg1: i32, %arg2: i32) -> (i32, i32, i32) {
    %c0_i32 = arith.constant 0 : i32
    %c0_i32_0 = arith.constant 0 : i32
    return %arg0, %c0_i32, %arg2 : i32, i32, i32
  }
  func.func @transform_2(%arg0: i32, %arg1: i32, %arg2: i32) -> (i32, i32) {
    %c0_i32 = arith.constant 0 : i32
    %c0_i32_0 = arith.constant 0 : i32
    %c0_i32_1 = arith.constant 0 : i32
    return %c0_i32, %c0_i32_0 : i32, i32
  }
  func.func @transform_3(%arg0: i32, %arg1: i32, %arg2: i32) -> (i32, i32) {
    %c0_i32 = arith.constant 0 : i32
    %c0_i32_0 = arith.constant 0 : i32
    %c0_i32_1 = arith.constant 0 : i32
    return %c0_i32, %c0_i32_0 : i32, i32
  }
  func.func @transform_4(%arg0: i32, %arg1: i32, %arg2: i32) -> (i32, i32) {
    %c0_i32 = arith.constant 0 : i32
    %c0_i32_0 = arith.constant 0 : i32
    %c0_i32_1 = arith.constant 0 : i32
    return %c0_i32, %c0_i32_0 : i32, i32
  }
  func.func @transform_5(%arg0: i32, %arg1: i32, %arg2: i32) -> (i32, i32) {
    %c0_i32 = arith.constant 0 : i32
    %c0_i32_0 = arith.constant 0 : i32
    %c0_i32_1 = arith.constant 0 : i32
    return %c0_i32, %c0_i32_0 : i32, i32
  }
  func.func @transform_6(%arg0: i32, %arg1: i32, %arg2: i32) -> (i32, i32) {
    %c0_i32 = arith.constant 0 : i32
    %c0_i32_0 = arith.constant 0 : i32
    %c0_i32_1 = arith.constant 0 : i32
    return %c0_i32, %c0_i32_0 : i32, i32
  }
  func.func @transform_7(%arg0: i32, %arg1: i32, %arg2: i32) -> (i32, i32) {
    %c0_i32 = arith.constant 0 : i32
    %c0_i32_0 = arith.constant 0 : i32
    %c0_i32_1 = arith.constant 0 : i32
    return %c0_i32, %c0_i32_0 : i32, i32
  }
  func.func @transform_8(%arg0: i32, %arg1: i32, %arg2: i32) -> (i32, i32, i32) {
    %c0_i32 = arith.constant 0 : i32
    %c0_i32_0 = arith.constant 0 : i32
    return %arg0, %c0_i32, %arg1 : i32, i32, i32
  }
}

</mosaic_0001>

<llo_original>
// kernel: tpu_custom_call.1
$region0: #{tpu_custom_call.1}
  #allocation0 [shape = 'u32[]', space=smem, size = 0x4, offset = 0x4, fixed_abs, tag = 'smem constant byte address 0x4 - core index']
  #allocation1 [shape = 'u32[144,128]{1,0:T(1,128)}', space=vmem, size = 0x12000, scoped, tag = 'internal scratch']
  %s0 = inlined_call_operand.vmem [shape: bf16[2,4,256], index: 0, kind: input, shape index: {}]
  %s1 = inlined_call_operand.vmem [shape: bf16[2,4,256], index: 1, kind: input, shape index: {}]
  %s2 = inlined_call_operand.vmem [shape: bf16[16,4], index: 2, kind: input, shape index: {}]
  %s3 = inlined_call_operand.vmem [shape: f32[16,1], index: 3, kind: input, shape index: {}]
  %s4 = inlined_call_operand.vmem [shape: bf16[32,4], index: 4, kind: input, shape index: {}]
  %s5 = inlined_call_operand.vmem [shape: f32[32,1], index: 5, kind: input, shape index: {}]
  %s6 = inlined_call_operand.vmem [shape: bf16[4,16], index: 6, kind: input, shape index: {}]
  %s7 = inlined_call_operand.vmem [shape: f32[4,1], index: 7, kind: input, shape index: {}]
  %s8 = inlined_call_operand.hbm [shape: bf16[2,4,256], index: 8, kind: output, shape index: {}]
  %s9 = sld [smem:[#allocation0]]
  $region65: #{tpu_custom_call.1} parent=0
    _
  %s11 = ssub.s32 1, %s9
  %s12 = scalar_select 0, %s11, %s9
  $region1: #{tpu_custom_call.1} parent=0
    #allocation2 [shape = 'u8[4096]{0}', space=vmem, size = 0x1000, scoped, tag = 'output window, operand 0']
    #allocation3 [shape = 's32[2]{0}', space=sflag, size = 0x8, scoped, tag = 'scoped memory for tpu_custom_call.1']
    %13 = vsyncpa [#allocation3], 0
    %s14 = scalar_lea.sflag [#allocation3], 1
    %15 = vsyncpa %s14, 0
    loop: start=0, step=1, limit=4
    $region2: #{tpu_custom_call.1} parent=1 // loop_pre_header
      _
    $region3: #{tpu_custom_call.1} parent=1 // loop_header
      %s17 = sphi 0, %s21
      %p18 = scmp.ge.s32.totalorder %s17, 4
      %s24 = sphi 0, %s43
      %s25 = sphi 0, %s39
      %s26 = sphi 0, %s35
      %s27 = sphi 0, %s24
      %s28 = sphi 0, %s25
      %s29 = sphi 0, %s26
      %s30 = sphi 0, %s27
      %s31 = sphi 0, %s28
      %s32 = sphi 0, %s29
      %s48 = sphi 0, %s50
      %s51 = sphi 0, %s48
      %s52 = sphi 0, %s51
      %s68 = sphi 0, %s52
      %s76 = sphi 0, %s78
      %s79 = sphi 0, %s76
      %s80 = sphi 0, %s79
      %s96 = sphi 0, %s80
      %s100 = sphi 0, %s100
      %s102 = sphi 0, %s100
      %s103 = sphi 0, %s102
      %s117 = sphi 0, %s103
      %s121 = sphi 0, %s121
      %s123 = sphi 0, %s121
      %s124 = sphi 0, %s123
      %s138 = sphi 0, %s124
      %s142 = sphi 0, %s142
      %s144 = sphi 0, %s142
      %s145 = sphi 0, %s144
      %s159 = sphi 0, %s145
      %s163 = sphi 0, %s163
      %s165 = sphi 0, %s163
      %s166 = sphi 0, %s165
      %s180 = sphi 0, %s166
      %s184 = sphi 0, %s184
      %s186 = sphi 0, %s184
      %s187 = sphi 0, %s186
      %s201 = sphi 0, %s187
      %s205 = sphi 0, %s205
      %s207 = sphi 0, %s205
      %s208 = sphi 0, %s207
      %s222 = sphi 0, %s208
      %s230 = sphi 0, %s232
      %s233 = sphi 0, %s230
      %s234 = sphi 0, %s233
      %s250 = sphi 0, %s234
    $region4: #{tpu_custom_call.1} parent=1 // loop_header_branch
      %20 = sbr.rel (%p18) target = $region8
    $region5: #{tpu_custom_call.1} parent=1 // loop_body
      %s22 = ssub.s32 %s17, 1
      %s23 = ssub.s32 %s17, 2
      %s33 = sadd.s32 1, %s26
      %p34 = scmp.ge.s32.totalorder %s33, 1
      %s35 = scalar_select %p34, 0, %s33
      %s36 = sadd.s32 1, %s25
      %s37 = scalar_select %p34, %s36, %s25
      %p38 = scmp.ge.s32.totalorder %s37, 1
      %s39 = scalar_select %p38, 0, %s37
      %s40 = sadd.s32 1, %s24
      %s41 = scalar_select %p38, %s40, %s24
      %p42 = scmp.ge.s32.totalorder %s41, 2
      %s43 = scalar_select %p42, 0, %s41
      %s44 = ssub.s32 %s24, %s43
      %s45 = ssub.s32 %s25, %s39
      %s46 = sor.u32 %s44, %s45
      %p47 = scmp.eq.s32.totalorder %s46, 0
      %s49 = sadd.s32 %s48, 1
      %s50 = scalar_select %p47, %s48, %s49
      %p53 = pneg %p47
      %p54 = scmp.eq.s32.totalorder %s17, 1
      %p55 = por %p53, %p54
      %p56 = scmp.ne.s32.totalorder %s48, %s51
      %p57 = scmp.eq.s32.totalorder %s17, 0
      %p58 = por %p56, %p57
      %p59 = scmp.ne.s32.totalorder %s48, %s51
      %p60 = scmp.eq.s32.totalorder %s22, 1
      %p61 = por %p59, %p60
      %p62 = scmp.ne.s32.totalorder %s51, %s52
      %p63 = scmp.eq.s32.totalorder %s22, 0
      %p64 = por %p62, %p63
      %p65 = scmp.ne.s32.totalorder %s51, %s52
      %p66 = scmp.eq.s32.totalorder %s23, 1
      %p67 = por %p65, %p66
      %p69 = scmp.ne.s32.totalorder %s52, %s68
      %p70 = scmp.eq.s32.totalorder %s23, 0
      %p71 = por %p69, %p70
      %s72 = ssub.s32 %s24, %s43
      %s73 = ssub.s32 %s26, %s35
      %s74 = sor.u32 %s72, %s73
      %p75 = scmp.eq.s32.totalorder %s74, 0
      %s77 = sadd.s32 %s76, 1
      %s78 = scalar_select %p75, %s76, %s77
      %p81 = pneg %p75
      %p82 = scmp.eq.s32.totalorder %s17, 1
      %p83 = por %p81, %p82
      %p84 = scmp.ne.s32.totalorder %s76, %s79
      %p85 = scmp.eq.s32.totalorder %s17, 0
      %p86 = por %p84, %p85
      %p87 = scmp.ne.s32.totalorder %s76, %s79
      %p88 = scmp.eq.s32.totalorder %s22, 1
      %p89 = por %p87, %p88
      %p90 = scmp.ne.s32.totalorder %s79, %s80
      %p91 = scmp.eq.s32.totalorder %s22, 0
      %p92 = por %p90, %p91
      %p93 = scmp.ne.s32.totalorder %s79, %s80
      %p94 = scmp.eq.s32.totalorder %s23, 1
      %p95 = por %p93, %p94
      %p97 = scmp.ne.s32.totalorder %s80, %s96
      %p98 = scmp.eq.s32.totalorder %s23, 0
      %p99 = por %p97, %p98
      %s101 = sadd.s32 %s100, 1
      %p104 = scmp.eq.s32.totalorder %s17, 1
      %p105 = scmp.ne.s32.totalorder %s100, %s102
      %p106 = scmp.eq.s32.totalorder %s17, 0
      %p107 = por %p105, %p106
      %p108 = scmp.ne.s32.totalorder %s100, %s102
      %p109 = scmp.eq.s32.totalorder %s22, 1
      %p110 = por %p108, %p109
      %p111 = scmp.ne.s32.totalorder %s102, %s103
      %p112 = scmp.eq.s32.totalorder %s22, 0
      %p113 = por %p111, %p112
      %p114 = scmp.ne.s32.totalorder %s102, %s103
      %p115 = scmp.eq.s32.totalorder %s23, 1
      %p116 = por %p114, %p115
      %p118 = scmp.ne.s32.totalorder %s103, %s117
      %p119 = scmp.eq.s32.totalorder %s23, 0
      %p120 = por %p118, %p119
      %s122 = sadd.s32 %s121, 1
      %p125 = scmp.eq.s32.totalorder %s17, 1
      %p126 = scmp.ne.s32.totalorder %s121, %s123
      %p127 = scmp.eq.s32.totalorder %s17, 0
      %p128 = por %p126, %p127
      %p129 = scmp.ne.s32.totalorder %s121, %s123
      %p130 = scmp.eq.s32.totalorder %s22, 1
      %p131 = por %p129, %p130
      %p132 = scmp.ne.s32.totalorder %s123, %s124
      %p133 = scmp.eq.s32.totalorder %s22, 0
      %p134 = por %p132, %p133
      %p135 = scmp.ne.s32.totalorder %s123, %s124
      %p136 = scmp.eq.s32.totalorder %s23, 1
      %p137 = por %p135, %p136
      %p139 = scmp.ne.s32.totalorder %s124, %s138
      %p140 = scmp.eq.s32.totalorder %s23, 0
      %p141 = por %p139, %p140
      %s143 = sadd.s32 %s142, 1
      %p146 = scmp.eq.s32.totalorder %s17, 1
      %p147 = scmp.ne.s32.totalorder %s142, %s144
      %p148 = scmp.eq.s32.totalorder %s17, 0
      %p149 = por %p147, %p148
      %p150 = scmp.ne.s32.totalorder %s142, %s144
      %p151 = scmp.eq.s32.totalorder %s22, 1
      %p152 = por %p150, %p151
      %p153 = scmp.ne.s32.totalorder %s144, %s145
      %p154 = scmp.eq.s32.totalorder %s22, 0
      %p155 = por %p153, %p154
      %p156 = scmp.ne.s32.totalorder %s144, %s145
      %p157 = scmp.eq.s32.totalorder %s23, 1
      %p158 = por %p156, %p157
      %p160 = scmp.ne.s32.totalorder %s145, %s159
      %p161 = scmp.eq.s32.totalorder %s23, 0
      %p162 = por %p160, %p161
      %s164 = sadd.s32 %s163, 1
      %p167 = scmp.eq.s32.totalorder %s17, 1
      %p168 = scmp.ne.s32.totalorder %s163, %s165
      %p169 = scmp.eq.s32.totalorder %s17, 0
      %p170 = por %p168, %p169
      %p171 = scmp.ne.s32.totalorder %s163, %s165
      %p172 = scmp.eq.s32.totalorder %s22, 1
      %p173 = por %p171, %p172
      %p174 = scmp.ne.s32.totalorder %s165, %s166
      %p175 = scmp.eq.s32.totalorder %s22, 0
      %p176 = por %p174, %p175
      %p177 = scmp.ne.s32.totalorder %s165, %s166
      %p178 = scmp.eq.s32.totalorder %s23, 1
      %p179 = por %p177, %p178
      %p181 = scmp.ne.s32.totalorder %s166, %s180
      %p182 = scmp.eq.s32.totalorder %s23, 0
      %p183 = por %p181, %p182
      %s185 = sadd.s32 %s184, 1
      %p188 = scmp.eq.s32.totalorder %s17, 1
      %p189 = scmp.ne.s32.totalorder %s184, %s186
      %p190 = scmp.eq.s32.totalorder %s17, 0
      %p191 = por %p189, %p190
      %p192 = scmp.ne.s32.totalorder %s184, %s186
      %p193 = scmp.eq.s32.totalorder %s22, 1
      %p194 = por %p192, %p193
      %p195 = scmp.ne.s32.totalorder %s186, %s187
      %p196 = scmp.eq.s32.totalorder %s22, 0
      %p197 = por %p195, %p196
      %p198 = scmp.ne.s32.totalorder %s186, %s187
      %p199 = scmp.eq.s32.totalorder %s23, 1
      %p200 = por %p198, %p199
      %p202 = scmp.ne.s32.totalorder %s187, %s201
      %p203 = scmp.eq.s32.totalorder %s23, 0
      %p204 = por %p202, %p203
      %s206 = sadd.s32 %s205, 1
      %p209 = scmp.eq.s32.totalorder %s17, 1
      %p210 = scmp.ne.s32.totalorder %s205, %s207
      %p211 = scmp.eq.s32.totalorder %s17, 0
      %p212 = por %p210, %p211
      %p213 = scmp.ne.s32.totalorder %s205, %s207
      %p214 = scmp.eq.s32.totalorder %s22, 1
      %p215 = por %p213, %p214
      %p216 = scmp.ne.s32.totalorder %s207, %s208
      %p217 = scmp.eq.s32.totalorder %s22, 0
      %p218 = por %p216, %p217
      %p219 = scmp.ne.s32.totalorder %s207, %s208
      %p220 = scmp.eq.s32.totalorder %s23, 1
      %p221 = por %p219, %p220
      %p223 = scmp.ne.s32.totalorder %s208, %s222
      %p224 = scmp.eq.s32.totalorder %s23, 0
      %p225 = por %p223, %p224
      %s226 = ssub.s32 %s24, %s43
      %s227 = ssub.s32 %s25, %s39
      %s228 = sor.u32 %s226, %s227
      %p229 = scmp.eq.s32.totalorder %s228, 0
      %s231 = sadd.s32 %s230, 1
      %s232 = scalar_select %p229, %s230, %s231
      %p235 = pneg %p229
      %p236 = scmp.eq.s32.totalorder %s17, 1
      %p237 = por %p235, %p236
      %p238 = scmp.ne.s32.totalorder %s230, %s233
      %p239 = scmp.eq.s32.totalorder %s17, 0
      %p240 = por %p238, %p239
      %p241 = scmp.ne.s32.totalorder %s230, %s233
      %p242 = scmp.eq.s32.totalorder %s22, 1
      %p243 = por %p241, %p242
      %p244 = scmp.ne.s32.totalorder %s233, %s234
      %p245 = scmp.eq.s32.totalorder %s22, 0
      %p246 = por %p244, %p245
      %p247 = scmp.ne.s32.totalorder %s233, %s234
      %p248 = scmp.eq.s32.totalorder %s23, 1
      %p249 = por %p247, %p248
      %p251 = scmp.ne.s32.totalorder %s234, %s250
      %p252 = scmp.eq.s32.totalorder %s23, 0
      %p253 = por %p251, %p252
      %p254 = scmp.le.s32.totalorder 1, %s17
      %p255 = scmp.lt.s32.totalorder %s17, 3
      %p256 = pnand %p254, %p255
      %p257 = pneg %p256
      // Predicated region
      $region9: #{tpu_custom_call.1} parent=5 // pred_check
        _
      $region10: #{tpu_custom_call.1} parent=5 // pred_check_branch
        %259 = sbr.rel (%p256) target = $region12
      $region11: #{tpu_custom_call.1} parent=5 // pred_region
        %s260 = ssub.s32 %s17, 1
        // Predicated region
        $region13: #{tpu_custom_call.1} parent=11 // pred_check
          %p261 = pneg %p113
        $region14: #{tpu_custom_call.1} parent=11 // pred_check_branch
          %263 = sbr.rel (%p261) target = $region16
        $region15: #{tpu_custom_call.1} parent=11 // pred_region
          _
        $region16: #{tpu_custom_call.1} parent=11 // pred_fallthru
          _
        // Predicated region
        $region17: #{tpu_custom_call.1} parent=11 // pred_check
          %p264 = pneg %p134
        $region18: #{tpu_custom_call.1} parent=11 // pred_check_branch
          %266 = sbr.rel (%p264) target = $region20
        $region19: #{tpu_custom_call.1} parent=11 // pred_region
          _
        $region20: #{tpu_custom_call.1} parent=11 // pred_fallthru
          _
        // Predicated region
        $region21: #{tpu_custom_call.1} parent=11 // pred_check
          %p267 = pneg %p155
        $region22: #{tpu_custom_call.1} parent=11 // pred_check_branch
          %269 = sbr.rel (%p267) target = $region24
        $region23: #{tpu_custom_call.1} parent=11 // pred_region
          _
        $region24: #{tpu_custom_call.1} parent=11 // pred_fallthru
          _
        // Predicated region
        $region25: #{tpu_custom_call.1} parent=11 // pred_check
          %p270 = pneg %p176
        $region26: #{tpu_custom_call.1} parent=11 // pred_check_branch
          %272 = sbr.rel (%p270) target = $region28
        $region27: #{tpu_custom_call.1} parent=11 // pred_region
          _
        $region28: #{tpu_custom_call.1} parent=11 // pred_fallthru
          _
        // Predicated region
        $region29: #{tpu_custom_call.1} parent=11 // pred_check
          %p273 = pneg %p197
        $region30: #{tpu_custom_call.1} parent=11 // pred_check_branch
          %275 = sbr.rel (%p273) target = $region32
        $region31: #{tpu_custom_call.1} parent=11 // pred_region
          _
        $region32: #{tpu_custom_call.1} parent=11 // pred_fallthru
          _
        // Predicated region
        $region33: #{tpu_custom_call.1} parent=11 // pred_check
          %p276 = pneg %p218
        $region34: #{tpu_custom_call.1} parent=11 // pred_check_branch
          %278 = sbr.rel (%p276) target = $region36
        $region35: #{tpu_custom_call.1} parent=11 // pred_region
          _
        $region36: #{tpu_custom_call.1} parent=11 // pred_fallthru
          _
      $region12: #{tpu_custom_call.1} parent=5 // pred_fallthru
        _
      %p279 = scmp.lt.s32.totalorder %s17, 2
      // Predicated region
      $region37: #{tpu_custom_call.1} parent=5 // pred_check
        %p280 = pneg %p279
      $region38: #{tpu_custom_call.1} parent=5 // pred_check_branch
        %282 = sbr.rel (%p280) target = $region40
      $region39: #{tpu_custom_call.1} parent=5 // pred_region
        // Predicated region
        $region41: #{tpu_custom_call.1} parent=39 // pred_check
          %p283 = pneg %p58
        $region42: #{tpu_custom_call.1} parent=39 // pred_check_branch
          %285 = sbr.rel (%p283) target = $region44
        $region43: #{tpu_custom_call.1} parent=39 // pred_region
          %s286 = smul.u32 2, %s25
          %p287 = scmp.lt.s32.totalorder %s24, 1
          %s288 = scalar_select %p287, %s24, 1
          %p289 = scmp.lt.s32.totalorder %s286, 1
          %s290 = scalar_select %p289, %s286, 1
          %s291 = smul.addr %s288, 2
          %s292 = sadd.s32 %s290, %s291
          %s293 = smul.addr %s292, 2
          %s294 = scalar_lea.vmem %s0, %s293
          %s295 = smul.u32 2, %s25
        $region44: #{tpu_custom_call.1} parent=39 // pred_fallthru
          _
        // Predicated region
        $region45: #{tpu_custom_call.1} parent=39 // pred_check
          %p296 = pneg %p86
        $region46: #{tpu_custom_call.1} parent=39 // pred_check_branch
          %298 = sbr.rel (%p296) target = $region48
        $region47: #{tpu_custom_call.1} parent=39 // pred_region
          %s299 = smul.u32 2, %s26
          %p300 = scmp.lt.s32.totalorder %s24, 1
          %s301 = scalar_select %p300, %s24, 1
          %p302 = scmp.lt.s32.totalorder %s299, 1
          %s303 = scalar_select %p302, %s299, 1
          %s304 = smul.addr %s301, 2
          %s305 = sadd.s32 %s303, %s304
          %s306 = smul.addr %s305, 2
          %s307 = scalar_lea.vmem %s1, %s306
          %s308 = smul.u32 2, %s26
        $region48: #{tpu_custom_call.1} parent=39 // pred_fallthru
          _
      $region40: #{tpu_custom_call.1} parent=5 // pred_fallthru
        _
      %p309 = scmp.le.s32.totalorder 1, %s17
      %p310 = scmp.lt.s32.totalorder %s17, 3
      %p311 = pnand %p309, %p310
      %p312 = pneg %p311
      // Predicated region
      $region49: #{tpu_custom_call.1} parent=5 // pred_check
        _
      $region50: #{tpu_custom_call.1} parent=5 // pred_check_branch
        %314 = sbr.rel (%p311) target = $region52
      $region51: #{tpu_custom_call.1} parent=5 // pred_region
        %s315 = ssub.s32 %s17, 1
        %s316 = smul.u32 2, %s28
        %p317 = scmp.lt.s32.totalorder %s27, 1
        %s318 = scalar_select %p317, %s27, 1
        %p319 = scmp.lt.s32.totalorder %s316, 1
        %s320 = scalar_select %p319, %s316, 1
        %s321 = smul.addr %s318, 2
        %s322 = sadd.s32 %s320, %s321
        %s323 = smul.addr %s322, 2
        %s324 = scalar_lea.vmem %s0, %s323
        %p325 = pneg %p64
        %p326 = pneg %p61
        %s327 = smul.u32 2, %s29
        %p328 = scmp.lt.s32.totalorder %s27, 1
        %s329 = scalar_select %p328, %s27, 1
        %p330 = scmp.lt.s32.totalorder %s327, 1
        %s331 = scalar_select %p330, %s327, 1
        %s332 = smul.addr %s329, 2
        %s333 = sadd.s32 %s331, %s332
        %s334 = smul.addr %s333, 2
        %s335 = scalar_lea.vmem %s1, %s334
        %p336 = pneg %p92
        %p337 = pneg %p89
        %p338 = pneg %p113
        %p339 = pneg %p110
        %p340 = pneg %p134
        %p341 = pneg %p131
        %p342 = pneg %p155
        %p343 = pneg %p152
        %p344 = pneg %p176
        %p345 = pneg %p173
        %p346 = pneg %p197
        %p347 = pneg %p194
        %p348 = pneg %p218
        %p349 = pneg %p215
        %p350 = pneg %p246
        %p351 = pneg %p243
        %s352 = sand.u32 %s233, 1
        %s353 = scalar_lea.sflag [#allocation3], %s352
        %s354 = sand.u32 %s233, 1
        %s355 = smul.addr %s354, 4
        %s356 = scalar_lea.vmem [#allocation2], %s355
        %s357 = smul.u32 2, %s28
        %p358 = scmp.lt.s32.totalorder %s27, 1
        %s359 = scalar_select %p358, %s27, 1
        %p360 = scmp.lt.s32.totalorder %s357, 1
        %s361 = scalar_select %p360, %s357, 1
        %s362 = smul.addr %s359, 2
        %s363 = sadd.s32 %s361, %s362
        %s364 = smul.addr %s363, 2
        %s365 = scalar_lea.vmem %s0, %s364
        %s366 = smul.u32 2, %s28
        %s367 = smul.u32 2, %s29
        %p368 = scmp.lt.s32.totalorder %s27, 1
        %s369 = scalar_select %p368, %s27, 1
        %p370 = scmp.lt.s32.totalorder %s367, 1
        %s371 = scalar_select %p370, %s367, 1
        %s372 = smul.addr %s369, 2
        %s373 = sadd.s32 %s371, %s372
        %s374 = smul.addr %s373, 2
        %s375 = scalar_lea.vmem %s1, %s374
        %s376 = smul.u32 2, %s29
        %s377 = smul.u32 2, %s28
        %v379 = vld [vmem:[%s2] sm:$0xf]
        %v380 = vld [vmem:[%s2 + $0x4] sm:$0xf]
        %v381 = vld [vmem:[%s365] sm:$0xf]
        %v382 = vld [vmem:[%s3] sm:$0xff]
        %v383 = vld [vmem:[%s3 + $0x8] sm:$0xff]
        %385 = vset.pattern.permute.xlu0 0
        %386 = vperm.xlu0 %385, %v382
        %v387 = vpop.permute.xlu0 %386
        %390 = vset.pattern.permute.xlu0 0
        %391 = vperm.xlu0 %390, %v383
        %v392 = vpop.permute.xlu0 %391
        %v396 = vunpack.c.l.b16 %v379
        %v397 = vunpack.c.l.b16 %v380
        %v398 = vpack.c.b16 %v397, %v396
        %v401 = vunpack.c.l.s4 1983009808
        %v402 = vunpack.c.0.s8 %v401
        %v403 = vlaneseq
        %v404 = vshrl.u32 %v403, 7
        %v405 = vsub.s32 %v402, %v404
        %v406 = vrot.slane %v381, %v405
        %v407 = vcombine.high %v406, %v406
        %vm408 = vcmask 31744
        %v410 = vsel %vm408, %v398, 0
        %vm412 = vcmask 1041408
        %v414 = vsel %vm412, %v406, 0
        %v417 = vsel %vm412, %v407, 0
        %419 = vmatprep.subr.bf16.mxu0 0
        %420 = vmatpush1.bf16.msra.mxu0 0
        %421 = vmatprep.subr.bf16.mxu0 0
        %422 = vmatpush1.bf16.msra.mxu0 0
        %423 = vmatprep.subr.bf16.mxu0 0
        %424 = vmatpush1.bf16.msra.mxu0 0
        %425 = vmatprep.subr.bf16.mxu0 0
        %426 = vmatpush1.bf16.msra.mxu0 0
        %427 = vmatprep.subr.bf16.mxu0 0
        %428 = vmatpush1.bf16.msra.mxu0 0
        %429 = vmatprep.subr.bf16.mxu0 0
        %430 = vmatpush1.bf16.msra.mxu0 0
        %431 = vmatprep.subr.bf16.mxu0 0
        %432 = vmatpush1.bf16.msra.mxu0 0
        %433 = vmatprep.subr.bf16.mxu0 %v417
        %434 = vmatpush1.bf16.msra.mxu0 %v414
        %435 = vmatprep.subr.bf16.mxu0 0
        %436 = vmatpush2.bf16.msra.mxu0 0
        %437 = vmatprep.subr.bf16.mxu0 0
        %438 = vmatpush2.bf16.msra.mxu0 0
        %439 = vmatprep.subr.bf16.mxu0 0
        %440 = vmatpush2.bf16.msra.mxu0 0
        %441 = vmatprep.subr.bf16.mxu0 0
        %442 = vmatpush2.bf16.msra.mxu0 0
        %443 = vmatprep.subr.bf16.mxu0 0
        %444 = vmatpush2.bf16.msra.mxu0 0
        %445 = vmatprep.subr.bf16.mxu0 0
        %446 = vmatpush2.bf16.msra.mxu0 0
        %447 = vmatprep.subr.bf16.mxu0 0
        %448 = vmatpush2.bf16.msra.mxu0 0
        %449 = vmatprep.subr.bf16.mxu0 0
        %450 = vmatpush2.bf16.msra.mxu0 0
        %451 = vmatprep.mubr.bf16.mxu0 0
        %452 = vmatmul.mubr.bf16.gmra.mxu0 %v410
        %v453 = vpop.f32.mrf.mxu0
        %v454 = vadd.f32 %v387, %v453
        %v455 = vpop.f32.mrf.mxu0
        %v456 = vadd.f32 %v387, %v455
        %v457 = vpop.f32.mrf.mxu0
        %v458 = vadd.f32 %v392, %v457
        %v459 = vpop.f32.mrf.mxu0
        %v460 = vadd.f32 %v392, %v459
        %461 = vdwg.mxu0
        %v462 = vpack.c.bf16 %v458, %v454
        %v463 = vpack.c.bf16 %v460, %v456
        %v466 = vunpack.c.l.b16 %v462
        %v467 = vunpack.c.l.b16 %v463
        %v468 = vunpack.c.h.b16 %v462
        %v469 = vunpack.c.h.b16 %v463
        %v470 = vld [vmem:[%s4] sm:$0xf]
        %v471 = vld [vmem:[%s4 + $0x4] sm:$0xf]
        %v472 = vld [vmem:[%s4 + $0x8] sm:$0xf]
        %v473 = vld [vmem:[%s4 + $0xc] sm:$0xf]
        %v474 = vld [vmem:[%s375] sm:$0xf]
        %v475 = vld [vmem:[%s5] sm:$0xff]
        %v476 = vld [vmem:[%s5 + $0x8] sm:$0xff]
        %v477 = vld [vmem:[%s5 + $0x10] sm:$0xff]
        %v478 = vld [vmem:[%s5 + $0x18] sm:$0xff]
        %480 = vset.pattern.permute.xlu0 0
        %481 = vperm.xlu0 %480, %v475
        %v482 = vpop.permute.xlu0 %481
        %485 = vset.pattern.permute.xlu0 0
        %486 = vperm.xlu0 %485, %v476
        %v487 = vpop.permute.xlu0 %486
        %490 = vset.pattern.permute.xlu0 0
        %491 = vperm.xlu0 %490, %v477
        %v492 = vpop.permute.xlu0 %491
        %495 = vset.pattern.permute.xlu0 0
        %496 = vperm.xlu0 %495, %v478
        %v497 = vpop.permute.xlu0 %496
        %v503 = vunpack.c.l.b16 %v470
        %v504 = vunpack.c.l.b16 %v471
        %v505 = vunpack.c.l.b16 %v472
        %v506 = vunpack.c.l.b16 %v473
        %v507 = vpack.c.b16 %v504, %v503
        %v508 = vpack.c.b16 %v506, %v505
        %v511 = vunpack.c.l.s4 1983009808
        %v512 = vunpack.c.0.s8 %v511
        %v513 = vlaneseq
        %v514 = vshrl.u32 %v513, 7
        %v515 = vsub.s32 %v512, %v514
        %v516 = vrot.slane %v474, %v515
        %v517 = vcombine.high %v516, %v516
        %v519 = vsel %vm408, %v507, 0
        %v522 = vsel %vm408, %v508, 0
        %v525 = vsel %vm412, %v516, 0
        %v528 = vsel %vm412, %v517, 0
        %530 = vmatprep.subr.bf16.mxu0 0
        %531 = vmatpush1.bf16.msra.mxu0 0
        %532 = vmatprep.subr.bf16.mxu0 0
        %533 = vmatpush1.bf16.msra.mxu0 0
        %534 = vmatprep.subr.bf16.mxu0 0
        %535 = vmatpush1.bf16.msra.mxu0 0
        %536 = vmatprep.subr.bf16.mxu0 0
        %537 = vmatpush1.bf16.msra.mxu0 0
        %538 = vmatprep.subr.bf16.mxu0 0
        %539 = vmatpush1.bf16.msra.mxu0 0
        %540 = vmatprep.subr.bf16.mxu0 0
        %541 = vmatpush1.bf16.msra.mxu0 0
        %542 = vmatprep.subr.bf16.mxu0 0
        %543 = vmatpush1.bf16.msra.mxu0 0
        %544 = vmatprep.subr.bf16.mxu0 %v528
        %545 = vmatpush1.bf16.msra.mxu0 %v525
        %546 = vmatprep.subr.bf16.mxu0 0
        %547 = vmatpush2.bf16.msra.mxu0 0
        %548 = vmatprep.subr.bf16.mxu0 0
        %549 = vmatpush2.bf16.msra.mxu0 0
        %550 = vmatprep.subr.bf16.mxu0 0
        %551 = vmatpush2.bf16.msra.mxu0 0
        %552 = vmatprep.subr.bf16.mxu0 0
        %553 = vmatpush2.bf16.msra.mxu0 0
        %554 = vmatprep.subr.bf16.mxu0 0
        %555 = vmatpush2.bf16.msra.mxu0 0
        %556 = vmatprep.subr.bf16.mxu0 0
        %557 = vmatpush2.bf16.msra.mxu0 0
        %558 = vmatprep.subr.bf16.mxu0 0
        %559 = vmatpush2.bf16.msra.mxu0 0
        %560 = vmatprep.subr.bf16.mxu0 0
        %561 = vmatpush2.bf16.msra.mxu0 0
        %562 = vmatprep.mubr.bf16.mxu0 0
        %563 = vmatmul.mubr.bf16.gmra.mxu0 %v519
        %v564 = vpop.f32.mrf.mxu0
        %v565 = vadd.f32 %v482, %v564
        %v566 = vpop.f32.mrf.mxu0
        %v567 = vadd.f32 %v482, %v566
        %v568 = vpop.f32.mrf.mxu0
        %v569 = vadd.f32 %v487, %v568
        %v570 = vpop.f32.mrf.mxu0
        %v571 = vadd.f32 %v487, %v570
        %572 = vmatprep.mubr.bf16.mxu0 0
        %573 = vmatmul.mubr.bf16.gmra.mxu0 %v522
        %v574 = vpop.f32.mrf.mxu0
        %v575 = vadd.f32 %v492, %v574
        %v576 = vpop.f32.mrf.mxu0
        %v577 = vadd.f32 %v492, %v576
        %v578 = vpop.f32.mrf.mxu0
        %v579 = vadd.f32 %v497, %v578
        %v580 = vpop.f32.mrf.mxu0
        %v581 = vadd.f32 %v497, %v580
        %582 = vdwg.mxu0
        %v583 = vpack.c.bf16 %v569, %v565
        %v584 = vpack.c.bf16 %v571, %v567
        %v585 = vpack.c.bf16 %v579, %v575
        %v586 = vpack.c.bf16 %v581, %v577
        %v589 = vunpack.c.l.b16 %v583
        %v590 = vunpack.c.l.b16 %v584
        %v591 = vunpack.c.h.b16 %v583
        %v592 = vunpack.c.h.b16 %v584
        %v595 = vunpack.c.l.b16 %v585
        %v596 = vunpack.c.l.b16 %v586
        %v597 = vunpack.c.h.b16 %v585
        %v598 = vunpack.c.h.b16 %v586
        %v599 = vpack.c.b16 %v589, %v589
        %v600 = vpack.c.b16 %v590, %v590
        %603 = vxpose.xlu0.c.b16.start [1/8] %v599, 128
        %604 = vxpose.xlu0.c.b16.cont [2/8] 0, 128
        %605 = vxpose.xlu0.c.b16.cont [3/8] 0, 128
        %606 = vxpose.xlu0.c.b16.cont [4/8] 0, 128
        %607 = vxpose.xlu0.c.b16.cont [5/8] 0, 128
        %608 = vxpose.xlu0.c.b16.cont [6/8] 0, 128
        %609 = vxpose.xlu0.c.b16.cont [7/8] 0, 128
        %610 = vxpose.xlu0.c.b16.end [8/8] 0, 128
        %v611 = vpop.trf.xlu0
        %v612 = vpop.trf.xlu0
        %v613 = vpop.trf.xlu0
        %v614 = vpop.trf.xlu0
        %v615 = vpop.trf.xlu0
        %v616 = vpop.trf.xlu0
        %v617 = vpop.trf.xlu0
        %v618 = vpop.trf.xlu0
        %619 = vxpose.xlu0.c.b16.start [1/8] %v600, 128
        %620 = vxpose.xlu0.c.b16.cont [2/8] 0, 128
        %621 = vxpose.xlu0.c.b16.cont [3/8] 0, 128
        %622 = vxpose.xlu0.c.b16.cont [4/8] 0, 128
        %623 = vxpose.xlu0.c.b16.cont [5/8] 0, 128
        %624 = vxpose.xlu0.c.b16.cont [6/8] 0, 128
        %625 = vxpose.xlu0.c.b16.cont [7/8] 0, 128
        %626 = vxpose.xlu0.c.b16.end [8/8] 0, 128
        %v627 = vpop.trf.xlu0
        %v628 = vpop.trf.xlu0
        %v629 = vpop.trf.xlu0
        %v630 = vpop.trf.xlu0
        %v631 = vpop.trf.xlu0
        %v632 = vpop.trf.xlu0
        %v633 = vpop.trf.xlu0
        %v634 = vpop.trf.xlu0
        %v635 = vpack.c.b16 %v466, %v466
        %v636 = vpack.c.b16 %v467, %v467
        %vm637 = vcmask 64512
        %v639 = vsel %vm637, %v611, 0
        %v642 = vsel %vm637, %v612, 0
        %v645 = vsel %vm637, %v613, 0
        %v648 = vsel %vm637, %v614, 0
        %v651 = vsel %vm637, %v615, 0
        %v654 = vsel %vm637, %v616, 0
        %v657 = vsel %vm637, %v617, 0
        %v660 = vsel %vm637, %v618, 0
        %v663 = vsel %vm637, %v627, 0
        %v666 = vsel %vm637, %v628, 0
        %v669 = vsel %vm637, %v629, 0
        %v672 = vsel %vm637, %v630, 0
        %v675 = vsel %vm637, %v631, 0
        %v678 = vsel %vm637, %v632, 0
        %v681 = vsel %vm637, %v633, 0
        %v684 = vsel %vm637, %v634, 0
        %vm686 = vcmask 1043456
        %v688 = vsel %vm686, %v635, 0
        %v691 = vsel %vm686, %v636, 0
        %693 = vmatprep.subr.bf16.mxu0 0
        %694 = vmatpush1.bf16.msra.mxu0 0
        %695 = vmatprep.subr.bf16.mxu0 0
        %696 = vmatpush1.bf16.msra.mxu0 0
        %697 = vmatprep.subr.bf16.mxu0 0
        %698 = vmatpush1.bf16.msra.mxu0 0
        %699 = vmatprep.subr.bf16.mxu0 0
        %700 = vmatpush1.bf16.msra.mxu0 0
        %701 = vmatprep.subr.bf16.mxu0 0
        %702 = vmatpush1.bf16.msra.mxu0 0
        %703 = vmatprep.subr.bf16.mxu0 0
        %704 = vmatpush1.bf16.msra.mxu0 0
        %705 = vmatprep.subr.bf16.mxu0 0
        %706 = vmatpush1.bf16.msra.mxu0 0
        %707 = vmatprep.subr.bf16.mxu0 %v691
        %708 = vmatpush1.bf16.msra.mxu0 %v688
        %709 = vmatprep.subr.bf16.mxu0 0
        %710 = vmatpush2.bf16.msra.mxu0 0
        %711 = vmatprep.subr.bf16.mxu0 0
        %712 = vmatpush2.bf16.msra.mxu0 0
        %713 = vmatprep.subr.bf16.mxu0 0
        %714 = vmatpush2.bf16.msra.mxu0 0
        %715 = vmatprep.subr.bf16.mxu0 0
        %716 = vmatpush2.bf16.msra.mxu0 0
        %717 = vmatprep.subr.bf16.mxu0 0
        %718 = vmatpush2.bf16.msra.mxu0 0
        %719 = vmatprep.subr.bf16.mxu0 0
        %720 = vmatpush2.bf16.msra.mxu0 0
        %721 = vmatprep.subr.bf16.mxu0 0
        %722 = vmatpush2.bf16.msra.mxu0 0
        %723 = vmatprep.subr.bf16.mxu0 0
        %724 = vmatpush2.bf16.msra.mxu0 0
        %725 = vmatprep.mubr.bf16.mxu0 0
        %726 = vmatmul.mubr.bf16.gmra.mxu0 %v639
        %v727 = vpop.f32.mrf.mxu0
        %v728 = vadd.f32 0.0, %v727
        %v729 = vpop.f32.mrf.mxu0
        %v730 = vadd.f32 0.0, %v729
        %v731 = vpop.f32.mrf.mxu0
        %v732 = vadd.f32 0.0, %v731
        %v733 = vpop.f32.mrf.mxu0
        %v734 = vadd.f32 0.0, %v733
        %735 = vmatprep.mubr.bf16.mxu0 0
        %736 = vmatmul.mubr.bf16.gmra.mxu0 %v642
        %v737 = vpop.f32.mrf.mxu0
        %v738 = vadd.f32 0.0, %v737
        %v739 = vpop.f32.mrf.mxu0
        %v740 = vadd.f32 0.0, %v739
        %v741 = vpop.f32.mrf.mxu0
        %v742 = vadd.f32 0.0, %v741
        %v743 = vpop.f32.mrf.mxu0
        %v744 = vadd.f32 0.0, %v743
        %745 = vmatprep.mubr.bf16.mxu0 0
        %746 = vmatmul.mubr.bf16.gmra.mxu0 %v645
        %v747 = vpop.f32.mrf.mxu0
        %v748 = vadd.f32 0.0, %v747
        %v749 = vpop.f32.mrf.mxu0
        %v750 = vadd.f32 0.0, %v749
        %v751 = vpop.f32.mrf.mxu0
        %v752 = vadd.f32 0.0, %v751
        %v753 = vpop.f32.mrf.mxu0
        %v754 = vadd.f32 0.0, %v753
        %755 = vmatprep.mubr.bf16.mxu0 0
        %756 = vmatmul.mubr.bf16.gmra.mxu0 %v648
        %v757 = vpop.f32.mrf.mxu0
        %v758 = vadd.f32 0.0, %v757
        %v759 = vpop.f32.mrf.mxu0
        %v760 = vadd.f32 0.0, %v759
        %v761 = vpop.f32.mrf.mxu0
        %v762 = vadd.f32 0.0, %v761
        %v763 = vpop.f32.mrf.mxu0
        %v764 = vadd.f32 0.0, %v763
        %765 = vmatprep.mubr.bf16.mxu0 0
        %766 = vmatmul.mubr.bf16.gmra.mxu0 %v651
        %v767 = vpop.f32.mrf.mxu0
        %v768 = vadd.f32 0.0, %v767
        %v769 = vpop.f32.mrf.mxu0
        %v770 = vadd.f32 0.0, %v769
        %v771 = vpop.f32.mrf.mxu0
        %v772 = vadd.f32 0.0, %v771
        %v773 = vpop.f32.mrf.mxu0
        %v774 = vadd.f32 0.0, %v773
        %775 = vmatprep.mubr.bf16.mxu0 0
        %776 = vmatmul.mubr.bf16.gmra.mxu0 %v654
        %v777 = vpop.f32.mrf.mxu0
        %v778 = vadd.f32 0.0, %v777
        %v779 = vpop.f32.mrf.mxu0
        %v780 = vadd.f32 0.0, %v779
        %v781 = vpop.f32.mrf.mxu0
        %v782 = vadd.f32 0.0, %v781
        %v783 = vpop.f32.mrf.mxu0
        %v784 = vadd.f32 0.0, %v783
        %785 = vmatprep.mubr.bf16.mxu0 0
        %786 = vmatmul.mubr.bf16.gmra.mxu0 %v657
        %v787 = vpop.f32.mrf.mxu0
        %v788 = vadd.f32 0.0, %v787
        %v789 = vpop.f32.mrf.mxu0
        %v790 = vadd.f32 0.0, %v789
        %v791 = vpop.f32.mrf.mxu0
        %v792 = vadd.f32 0.0, %v791
        %v793 = vpop.f32.mrf.mxu0
        %v794 = vadd.f32 0.0, %v793
        %795 = vmatprep.mubr.bf16.mxu0 0
        %796 = vmatmul.mubr.bf16.gmra.mxu0 %v660
        %v797 = vpop.f32.mrf.mxu0
        %v798 = vadd.f32 0.0, %v797
        %v799 = vpop.f32.mrf.mxu0
        %v800 = vadd.f32 0.0, %v799
        %v801 = vpop.f32.mrf.mxu0
        %v802 = vadd.f32 0.0, %v801
        %v803 = vpop.f32.mrf.mxu0
        %v804 = vadd.f32 0.0, %v803
        %805 = vmatprep.mubr.bf16.mxu0 0
        %806 = vmatmul.mubr.bf16.gmra.mxu0 %v663
        %v807 = vpop.f32.mrf.mxu0
        %v808 = vadd.f32 0.0, %v807
        %v809 = vpop.f32.mrf.mxu0
        %v810 = vadd.f32 0.0, %v809
        %v811 = vpop.f32.mrf.mxu0
        %v812 = vadd.f32 0.0, %v811
        %v813 = vpop.f32.mrf.mxu0
        %v814 = vadd.f32 0.0, %v813
        %815 = vmatprep.mubr.bf16.mxu0 0
        %816 = vmatmul.mubr.bf16.gmra.mxu0 %v666
        %v817 = vpop.f32.mrf.mxu0
        %v818 = vadd.f32 0.0, %v817
        %v819 = vpop.f32.mrf.mxu0
        %v820 = vadd.f32 0.0, %v819
        %v821 = vpop.f32.mrf.mxu0
        %v822 = vadd.f32 0.0, %v821
        %v823 = vpop.f32.mrf.mxu0
        %v824 = vadd.f32 0.0, %v823
        %825 = vmatprep.mubr.bf16.mxu0 0
        %826 = vmatmul.mubr.bf16.gmra.mxu0 %v669
        %v827 = vpop.f32.mrf.mxu0
        %v828 = vadd.f32 0.0, %v827
        %v829 = vpop.f32.mrf.mxu0
        %v830 = vadd.f32 0.0, %v829
        %v831 = vpop.f32.mrf.mxu0
        %v832 = vadd.f32 0.0, %v831
        %v833 = vpop.f32.mrf.mxu0
        %v834 = vadd.f32 0.0, %v833
        %835 = vmatprep.mubr.bf16.mxu0 0
        %836 = vmatmul.mubr.bf16.gmra.mxu0 %v672
        %v837 = vpop.f32.mrf.mxu0
        %v838 = vadd.f32 0.0, %v837
        %v839 = vpop.f32.mrf.mxu0
        %v840 = vadd.f32 0.0, %v839
        %v841 = vpop.f32.mrf.mxu0
        %v842 = vadd.f32 0.0, %v841
        %v843 = vpop.f32.mrf.mxu0
        %v844 = vadd.f32 0.0, %v843
        %845 = vmatprep.mubr.bf16.mxu0 0
        %846 = vmatmul.mubr.bf16.gmra.mxu0 %v675
        %v847 = vpop.f32.mrf.mxu0
        %v848 = vadd.f32 0.0, %v847
        %v849 = vpop.f32.mrf.mxu0
        %v850 = vadd.f32 0.0, %v849
        %v851 = vpop.f32.mrf.mxu0
        %v852 = vadd.f32 0.0, %v851
        %v853 = vpop.f32.mrf.mxu0
        %v854 = vadd.f32 0.0, %v853
        %855 = vmatprep.mubr.bf16.mxu0 0
        %856 = vmatmul.mubr.bf16.gmra.mxu0 %v678
        %v857 = vpop.f32.mrf.mxu0
        %v858 = vadd.f32 0.0, %v857
        %v859 = vpop.f32.mrf.mxu0
        %v860 = vadd.f32 0.0, %v859
        %v861 = vpop.f32.mrf.mxu0
        %v862 = vadd.f32 0.0, %v861
        %v863 = vpop.f32.mrf.mxu0
        %v864 = vadd.f32 0.0, %v863
        %865 = vmatprep.mubr.bf16.mxu0 0
        %866 = vmatmul.mubr.bf16.gmra.mxu0 %v681
        %v867 = vpop.f32.mrf.mxu0
        %v868 = vadd.f32 0.0, %v867
        %v869 = vpop.f32.mrf.mxu0
        %v870 = vadd.f32 0.0, %v869
        %v871 = vpop.f32.mrf.mxu0
        %v872 = vadd.f32 0.0, %v871
        %v873 = vpop.f32.mrf.mxu0
        %v874 = vadd.f32 0.0, %v873
        %875 = vmatprep.mubr.bf16.mxu0 0
        %876 = vmatmul.mubr.bf16.gmra.mxu0 %v684
        %v877 = vpop.f32.mrf.mxu0
        %v878 = vadd.f32 0.0, %v877
        %v879 = vpop.f32.mrf.mxu0
        %v880 = vadd.f32 0.0, %v879
        %v881 = vpop.f32.mrf.mxu0
        %v882 = vadd.f32 0.0, %v881
        %v883 = vpop.f32.mrf.mxu0
        %v884 = vadd.f32 0.0, %v883
        %885 = vdwg.mxu0
        %v886 = vpack.c.b16 %v591, %v591
        %v887 = vpack.c.b16 %v592, %v592
        %890 = vxpose.xlu0.c.b16.start [1/8] %v886, 128
        %891 = vxpose.xlu0.c.b16.cont [2/8] 0, 128
        %892 = vxpose.xlu0.c.b16.cont [3/8] 0, 128
        %893 = vxpose.xlu0.c.b16.cont [4/8] 0, 128
        %894 = vxpose.xlu0.c.b16.cont [5/8] 0, 128
        %895 = vxpose.xlu0.c.b16.cont [6/8] 0, 128
        %896 = vxpose.xlu0.c.b16.cont [7/8] 0, 128
        %897 = vxpose.xlu0.c.b16.end [8/8] 0, 128
        %v898 = vpop.trf.xlu0
        %v899 = vpop.trf.xlu0
        %v900 = vpop.trf.xlu0
        %v901 = vpop.trf.xlu0
        %v902 = vpop.trf.xlu0
        %v903 = vpop.trf.xlu0
        %v904 = vpop.trf.xlu0
        %v905 = vpop.trf.xlu0
        %906 = vxpose.xlu0.c.b16.start [1/8] %v887, 128
        %907 = vxpose.xlu0.c.b16.cont [2/8] 0, 128
        %908 = vxpose.xlu0.c.b16.cont [3/8] 0, 128
        %909 = vxpose.xlu0.c.b16.cont [4/8] 0, 128
        %910 = vxpose.xlu0.c.b16.cont [5/8] 0, 128
        %911 = vxpose.xlu0.c.b16.cont [6/8] 0, 128
        %912 = vxpose.xlu0.c.b16.cont [7/8] 0, 128
        %913 = vxpose.xlu0.c.b16.end [8/8] 0, 128
        %v914 = vpop.trf.xlu0
        %v915 = vpop.trf.xlu0
        %v916 = vpop.trf.xlu0
        %v917 = vpop.trf.xlu0
        %v918 = vpop.trf.xlu0
        %v919 = vpop.trf.xlu0
        %v920 = vpop.trf.xlu0
        %v921 = vpop.trf.xlu0
        %v922 = vpack.c.b16 %v468, %v468
        %v923 = vpack.c.b16 %v469, %v469
        %v925 = vsel %vm637, %v898, 0
        %v928 = vsel %vm637, %v899, 0
        %v931 = vsel %vm637, %v900, 0
        %v934 = vsel %vm637, %v901, 0
        %v937 = vsel %vm637, %v902, 0
        %v940 = vsel %vm637, %v903, 0
        %v943 = vsel %vm637, %v904, 0
        %v946 = vsel %vm637, %v905, 0
        %v949 = vsel %vm637, %v914, 0
        %v952 = vsel %vm637, %v915, 0
        %v955 = vsel %vm637, %v916, 0
        %v958 = vsel %vm637, %v917, 0
        %v961 = vsel %vm637, %v918, 0
        %v964 = vsel %vm637, %v919, 0
        %v967 = vsel %vm637, %v920, 0
        %v970 = vsel %vm637, %v921, 0
        %v973 = vsel %vm686, %v922, 0
        %v976 = vsel %vm686, %v923, 0
        %978 = vmatprep.subr.bf16.mxu0 0
        %979 = vmatpush1.bf16.msra.mxu0 0
        %980 = vmatprep.subr.bf16.mxu0 0
        %981 = vmatpush1.bf16.msra.mxu0 0
        %982 = vmatprep.subr.bf16.mxu0 0
        %983 = vmatpush1.bf16.msra.mxu0 0
        %984 = vmatprep.subr.bf16.mxu0 0
        %985 = vmatpush1.bf16.msra.mxu0 0
        %986 = vmatprep.subr.bf16.mxu0 0
        %987 = vmatpush1.bf16.msra.mxu0 0
        %988 = vmatprep.subr.bf16.mxu0 0
        %989 = vmatpush1.bf16.msra.mxu0 0
        %990 = vmatprep.subr.bf16.mxu0 0
        %991 = vmatpush1.bf16.msra.mxu0 0
        %992 = vmatprep.subr.bf16.mxu0 %v976
        %993 = vmatpush1.bf16.msra.mxu0 %v973
        %994 = vmatprep.subr.bf16.mxu0 0
        %995 = vmatpush2.bf16.msra.mxu0 0
        %996 = vmatprep.subr.bf16.mxu0 0
        %997 = vmatpush2.bf16.msra.mxu0 0
        %998 = vmatprep.subr.bf16.mxu0 0
        %999 = vmatpush2.bf16.msra.mxu0 0
        %1000 = vmatprep.subr.bf16.mxu0 0
        %1001 = vmatpush2.bf16.msra.mxu0 0
        %1002 = vmatprep.subr.bf16.mxu0 0
        %1003 = vmatpush2.bf16.msra.mxu0 0
        %1004 = vmatprep.subr.bf16.mxu0 0
        %1005 = vmatpush2.bf16.msra.mxu0 0
        %1006 = vmatprep.subr.bf16.mxu0 0
        %1007 = vmatpush2.bf16.msra.mxu0 0
        %1008 = vmatprep.subr.bf16.mxu0 0
        %1009 = vmatpush2.bf16.msra.mxu0 0
        %1010 = vmatprep.mubr.bf16.mxu0 0
        %1011 = vmatmul.mubr.bf16.gmra.mxu0 %v925
        %v1012 = vpop.f32.mrf.mxu0
        %v1013 = vadd.f32 0.0, %v1012
        %v1014 = vpop.f32.mrf.mxu0
        %v1015 = vadd.f32 0.0, %v1014
        %v1016 = vpop.f32.mrf.mxu0
        %v1017 = vadd.f32 0.0, %v1016
        %v1018 = vpop.f32.mrf.mxu0
        %v1019 = vadd.f32 0.0, %v1018
        %1020 = vmatprep.mubr.bf16.mxu0 0
        %1021 = vmatmul.mubr.bf16.gmra.mxu0 %v928
        %v1022 = vpop.f32.mrf.mxu0
        %v1023 = vadd.f32 0.0, %v1022
        %v1024 = vpop.f32.mrf.mxu0
        %v1025 = vadd.f32 0.0, %v1024
        %v1026 = vpop.f32.mrf.mxu0
        %v1027 = vadd.f32 0.0, %v1026
        %v1028 = vpop.f32.mrf.mxu0
        %v1029 = vadd.f32 0.0, %v1028
        %1030 = vmatprep.mubr.bf16.mxu0 0
        %1031 = vmatmul.mubr.bf16.gmra.mxu0 %v931
        %v1032 = vpop.f32.mrf.mxu0
        %v1033 = vadd.f32 0.0, %v1032
        %v1034 = vpop.f32.mrf.mxu0
        %v1035 = vadd.f32 0.0, %v1034
        %v1036 = vpop.f32.mrf.mxu0
        %v1037 = vadd.f32 0.0, %v1036
        %v1038 = vpop.f32.mrf.mxu0
        %v1039 = vadd.f32 0.0, %v1038
        %1040 = vmatprep.mubr.bf16.mxu0 0
        %1041 = vmatmul.mubr.bf16.gmra.mxu0 %v934
        %v1042 = vpop.f32.mrf.mxu0
        %v1043 = vadd.f32 0.0, %v1042
        %v1044 = vpop.f32.mrf.mxu0
        %v1045 = vadd.f32 0.0, %v1044
        %v1046 = vpop.f32.mrf.mxu0
        %v1047 = vadd.f32 0.0, %v1046
        %v1048 = vpop.f32.mrf.mxu0
        %v1049 = vadd.f32 0.0, %v1048
        %1050 = vmatprep.mubr.bf16.mxu0 0
        %1051 = vmatmul.mubr.bf16.gmra.mxu0 %v937
        %v1052 = vpop.f32.mrf.mxu0
        %v1053 = vadd.f32 0.0, %v1052
        %v1054 = vpop.f32.mrf.mxu0
        %v1055 = vadd.f32 0.0, %v1054
        %v1056 = vpop.f32.mrf.mxu0
        %v1057 = vadd.f32 0.0, %v1056
        %v1058 = vpop.f32.mrf.mxu0
        %v1059 = vadd.f32 0.0, %v1058
        %1060 = vmatprep.mubr.bf16.mxu0 0
        %1061 = vmatmul.mubr.bf16.gmra.mxu0 %v940
        %v1062 = vpop.f32.mrf.mxu0
        %v1063 = vadd.f32 0.0, %v1062
        %v1064 = vpop.f32.mrf.mxu0
        %v1065 = vadd.f32 0.0, %v1064
        %v1066 = vpop.f32.mrf.mxu0
        %v1067 = vadd.f32 0.0, %v1066
        %v1068 = vpop.f32.mrf.mxu0
        %v1069 = vadd.f32 0.0, %v1068
        %1070 = vmatprep.mubr.bf16.mxu0 0
        %1071 = vmatmul.mubr.bf16.gmra.mxu0 %v943
        %v1072 = vpop.f32.mrf.mxu0
        %v1073 = vadd.f32 0.0, %v1072
        %v1074 = vpop.f32.mrf.mxu0
        %v1075 = vadd.f32 0.0, %v1074
        %v1076 = vpop.f32.mrf.mxu0
        %v1077 = vadd.f32 0.0, %v1076
        %v1078 = vpop.f32.mrf.mxu0
        %v1079 = vadd.f32 0.0, %v1078
        %1080 = vmatprep.mubr.bf16.mxu0 0
        %1081 = vmatmul.mubr.bf16.gmra.mxu0 %v946
        %v1082 = vpop.f32.mrf.mxu0
        %v1083 = vadd.f32 0.0, %v1082
        %v1084 = vpop.f32.mrf.mxu0
        %v1085 = vadd.f32 0.0, %v1084
        %v1086 = vpop.f32.mrf.mxu0
        %v1087 = vadd.f32 0.0, %v1086
        %v1088 = vpop.f32.mrf.mxu0
        %v1089 = vadd.f32 0.0, %v1088
        %1090 = vmatprep.mubr.bf16.mxu0 0
        %1091 = vmatmul.mubr.bf16.gmra.mxu0 %v949
        %v1092 = vpop.f32.mrf.mxu0
        %v1093 = vadd.f32 0.0, %v1092
        %v1094 = vpop.f32.mrf.mxu0
        %v1095 = vadd.f32 0.0, %v1094
        %v1096 = vpop.f32.mrf.mxu0
        %v1097 = vadd.f32 0.0, %v1096
        %v1098 = vpop.f32.mrf.mxu0
        %v1099 = vadd.f32 0.0, %v1098
        %1100 = vmatprep.mubr.bf16.mxu0 0
        %1101 = vmatmul.mubr.bf16.gmra.mxu0 %v952
        %v1102 = vpop.f32.mrf.mxu0
        %v1103 = vadd.f32 0.0, %v1102
        %v1104 = vpop.f32.mrf.mxu0
        %v1105 = vadd.f32 0.0, %v1104
        %v1106 = vpop.f32.mrf.mxu0
        %v1107 = vadd.f32 0.0, %v1106
        %v1108 = vpop.f32.mrf.mxu0
        %v1109 = vadd.f32 0.0, %v1108
        %1110 = vmatprep.mubr.bf16.mxu0 0
        %1111 = vmatmul.mubr.bf16.gmra.mxu0 %v955
        %v1112 = vpop.f32.mrf.mxu0
        %v1113 = vadd.f32 0.0, %v1112
        %v1114 = vpop.f32.mrf.mxu0
        %v1115 = vadd.f32 0.0, %v1114
        %v1116 = vpop.f32.mrf.mxu0
        %v1117 = vadd.f32 0.0, %v1116
        %v1118 = vpop.f32.mrf.mxu0
        %v1119 = vadd.f32 0.0, %v1118
        %1120 = vmatprep.mubr.bf16.mxu0 0
        %1121 = vmatmul.mubr.bf16.gmra.mxu0 %v958
        %v1122 = vpop.f32.mrf.mxu0
        %v1123 = vadd.f32 0.0, %v1122
        %v1124 = vpop.f32.mrf.mxu0
        %v1125 = vadd.f32 0.0, %v1124
        %v1126 = vpop.f32.mrf.mxu0
        %v1127 = vadd.f32 0.0, %v1126
        %v1128 = vpop.f32.mrf.mxu0
        %v1129 = vadd.f32 0.0, %v1128
        %1130 = vmatprep.mubr.bf16.mxu0 0
        %1131 = vmatmul.mubr.bf16.gmra.mxu0 %v961
        %v1132 = vpop.f32.mrf.mxu0
        %v1133 = vadd.f32 0.0, %v1132
        %v1134 = vpop.f32.mrf.mxu0
        %v1135 = vadd.f32 0.0, %v1134
        %v1136 = vpop.f32.mrf.mxu0
        %v1137 = vadd.f32 0.0, %v1136
        %v1138 = vpop.f32.mrf.mxu0
        %v1139 = vadd.f32 0.0, %v1138
        %1140 = vmatprep.mubr.bf16.mxu0 0
        %1141 = vmatmul.mubr.bf16.gmra.mxu0 %v964
        %v1142 = vpop.f32.mrf.mxu0
        %v1143 = vadd.f32 0.0, %v1142
        %v1144 = vpop.f32.mrf.mxu0
        %v1145 = vadd.f32 0.0, %v1144
        %v1146 = vpop.f32.mrf.mxu0
        %v1147 = vadd.f32 0.0, %v1146
        %v1148 = vpop.f32.mrf.mxu0
        %v1149 = vadd.f32 0.0, %v1148
        %1150 = vmatprep.mubr.bf16.mxu0 0
        %1151 = vmatmul.mubr.bf16.gmra.mxu0 %v967
        %v1152 = vpop.f32.mrf.mxu0
        %v1153 = vadd.f32 0.0, %v1152
        %v1154 = vpop.f32.mrf.mxu0
        %v1155 = vadd.f32 0.0, %v1154
        %v1156 = vpop.f32.mrf.mxu0
        %v1157 = vadd.f32 0.0, %v1156
        %v1158 = vpop.f32.mrf.mxu0
        %v1159 = vadd.f32 0.0, %v1158
        %1160 = vmatprep.mubr.bf16.mxu0 0
        %1161 = vmatmul.mubr.bf16.gmra.mxu0 %v970
        %v1162 = vpop.f32.mrf.mxu0
        %v1163 = vadd.f32 0.0, %v1162
        %v1164 = vpop.f32.mrf.mxu0
        %v1165 = vadd.f32 0.0, %v1164
        %v1166 = vpop.f32.mrf.mxu0
        %v1167 = vadd.f32 0.0, %v1166
        %v1168 = vpop.f32.mrf.mxu0
        %v1169 = vadd.f32 0.0, %v1168
        %1170 = vdwg.mxu0
        %v1171 = vmax.f32 %v728, %v732
        %v1172 = vmax.f32 %v1171, %v738
        %v1173 = vmax.f32 %v1172, %v742
        %v1174 = vmax.f32 %v1173, %v748
        %v1175 = vmax.f32 %v1174, %v752
        %v1176 = vmax.f32 %v1175, %v758
        %v1177 = vmax.f32 %v1176, %v762
        %v1178 = vmax.f32 %v1177, %v768
        %v1179 = vmax.f32 %v1178, %v772
        %v1180 = vmax.f32 %v1179, %v778
        %v1181 = vmax.f32 %v1180, %v782
        %v1182 = vmax.f32 %v1181, %v788
        %v1183 = vmax.f32 %v1182, %v792
        %v1184 = vmax.f32 %v1183, %v798
        %v1185 = vmax.f32 %v1184, %v802
        %v1186 = vmax.f32 %v1185, %v808
        %v1187 = vmax.f32 %v1186, %v812
        %v1188 = vmax.f32 %v1187, %v818
        %v1189 = vmax.f32 %v1188, %v822
        %v1190 = vmax.f32 %v1189, %v828
        %v1191 = vmax.f32 %v1190, %v832
        %v1192 = vmax.f32 %v1191, %v838
        %v1193 = vmax.f32 %v1192, %v842
        %v1194 = vmax.f32 %v1193, %v848
        %v1195 = vmax.f32 %v1194, %v852
        %v1196 = vmax.f32 %v1195, %v858
        %v1197 = vmax.f32 %v1196, %v862
        %v1198 = vmax.f32 %v1197, %v868
        %v1199 = vmax.f32 %v1198, %v872
        %v1200 = vmax.f32 %v1199, %v878
        %v1201 = vmax.f32 %v1200, %v882
        %v1202 = vrot.slane %v1201, 4
        %v1203 = vmax.f32 %v1201, %v1202
        %v1204 = vrot.slane %v1203, 2
        %v1205 = vmax.f32 %v1203, %v1204
        %v1206 = vrot.slane %v1205, 1
        %v1207 = vmax.f32 %v1205, %v1206
        %v1208 = vmax.f32 %v730, %v734
        %v1209 = vmax.f32 %v1208, %v740
        %v1210 = vmax.f32 %v1209, %v744
        %v1211 = vmax.f32 %v1210, %v750
        %v1212 = vmax.f32 %v1211, %v754
        %v1213 = vmax.f32 %v1212, %v760
        %v1214 = vmax.f32 %v1213, %v764
        %v1215 = vmax.f32 %v1214, %v770
        %v1216 = vmax.f32 %v1215, %v774
        %v1217 = vmax.f32 %v1216, %v780
        %v1218 = vmax.f32 %v1217, %v784
        %v1219 = vmax.f32 %v1218, %v790
        %v1220 = vmax.f32 %v1219, %v794
        %v1221 = vmax.f32 %v1220, %v800
        %v1222 = vmax.f32 %v1221, %v804
        %v1223 = vmax.f32 %v1222, %v810
        %v1224 = vmax.f32 %v1223, %v814
        %v1225 = vmax.f32 %v1224, %v820
        %v1226 = vmax.f32 %v1225, %v824
        %v1227 = vmax.f32 %v1226, %v830
        %v1228 = vmax.f32 %v1227, %v834
        %v1229 = vmax.f32 %v1228, %v840
        %v1230 = vmax.f32 %v1229, %v844
        %v1231 = vmax.f32 %v1230, %v850
        %v1232 = vmax.f32 %v1231, %v854
        %v1233 = vmax.f32 %v1232, %v860
        %v1234 = vmax.f32 %v1233, %v864
        %v1235 = vmax.f32 %v1234, %v870
        %v1236 = vmax.f32 %v1235, %v874
        %v1237 = vmax.f32 %v1236, %v880
        %v1238 = vmax.f32 %v1237, %v884
        %v1239 = vrot.slane %v1238, 4
        %v1240 = vmax.f32 %v1238, %v1239
        %v1241 = vrot.slane %v1240, 2
        %v1242 = vmax.f32 %v1240, %v1241
        %v1243 = vrot.slane %v1242, 1
        %v1244 = vmax.f32 %v1242, %v1243
        %v1245 = vmax.f32 %v1013, %v1017
        %v1246 = vmax.f32 %v1245, %v1023
        %v1247 = vmax.f32 %v1246, %v1027
        %v1248 = vmax.f32 %v1247, %v1033
        %v1249 = vmax.f32 %v1248, %v1037
        %v1250 = vmax.f32 %v1249, %v1043
        %v1251 = vmax.f32 %v1250, %v1047
        %v1252 = vmax.f32 %v1251, %v1053
        %v1253 = vmax.f32 %v1252, %v1057
        %v1254 = vmax.f32 %v1253, %v1063
        %v1255 = vmax.f32 %v1254, %v1067
        %v1256 = vmax.f32 %v1255, %v1073
        %v1257 = vmax.f32 %v1256, %v1077
        %v1258 = vmax.f32 %v1257, %v1083
        %v1259 = vmax.f32 %v1258, %v1087
        %v1260 = vmax.f32 %v1259, %v1093
        %v1261 = vmax.f32 %v1260, %v1097
        %v1262 = vmax.f32 %v1261, %v1103
        %v1263 = vmax.f32 %v1262, %v1107
        %v1264 = vmax.f32 %v1263, %v1113
        %v1265 = vmax.f32 %v1264, %v1117
        %v1266 = vmax.f32 %v1265, %v1123
        %v1267 = vmax.f32 %v1266, %v1127
        %v1268 = vmax.f32 %v1267, %v1133
        %v1269 = vmax.f32 %v1268, %v1137
        %v1270 = vmax.f32 %v1269, %v1143
        %v1271 = vmax.f32 %v1270, %v1147
        %v1272 = vmax.f32 %v1271, %v1153
        %v1273 = vmax.f32 %v1272, %v1157
        %v1274 = vmax.f32 %v1273, %v1163
        %v1275 = vmax.f32 %v1274, %v1167
        %v1276 = vrot.slane %v1275, 4
        %v1277 = vmax.f32 %v1275, %v1276
        %v1278 = vrot.slane %v1277, 2
        %v1279 = vmax.f32 %v1277, %v1278
        %v1280 = vrot.slane %v1279, 1
        %v1281 = vmax.f32 %v1279, %v1280
        %v1282 = vmax.f32 %v1015, %v1019
        %v1283 = vmax.f32 %v1282, %v1025
        %v1284 = vmax.f32 %v1283, %v1029
        %v1285 = vmax.f32 %v1284, %v1035
        %v1286 = vmax.f32 %v1285, %v1039
        %v1287 = vmax.f32 %v1286, %v1045
        %v1288 = vmax.f32 %v1287, %v1049
        %v1289 = vmax.f32 %v1288, %v1055
        %v1290 = vmax.f32 %v1289, %v1059
        %v1291 = vmax.f32 %v1290, %v1065
        %v1292 = vmax.f32 %v1291, %v1069
        %v1293 = vmax.f32 %v1292, %v1075
        %v1294 = vmax.f32 %v1293, %v1079
        %v1295 = vmax.f32 %v1294, %v1085
        %v1296 = vmax.f32 %v1295, %v1089
        %v1297 = vmax.f32 %v1296, %v1095
        %v1298 = vmax.f32 %v1297, %v1099
        %v1299 = vmax.f32 %v1298, %v1105
        %v1300 = vmax.f32 %v1299, %v1109
        %v1301 = vmax.f32 %v1300, %v1115
        %v1302 = vmax.f32 %v1301, %v1119
        %v1303 = vmax.f32 %v1302, %v1125
        %v1304 = vmax.f32 %v1303, %v1129
        %v1305 = vmax.f32 %v1304, %v1135
        %v1306 = vmax.f32 %v1305, %v1139
        %v1307 = vmax.f32 %v1306, %v1145
        %v1308 = vmax.f32 %v1307, %v1149
        %v1309 = vmax.f32 %v1308, %v1155
        %v1310 = vmax.f32 %v1309, %v1159
        %v1311 = vmax.f32 %v1310, %v1165
        %v1312 = vmax.f32 %v1311, %v1169
        %v1313 = vrot.slane %v1312, 4
        %v1314 = vmax.f32 %v1312, %v1313
        %v1315 = vrot.slane %v1314, 2
        %v1316 = vmax.f32 %v1314, %v1315
        %v1317 = vrot.slane %v1316, 1
        %v1318 = vmax.f32 %v1316, %v1317
        %v1319 = vsub.f32 %v728, %v1207
        %v1320 = vsub.f32 %v730, %v1244
        %v1321 = vsub.f32 %v732, %v1207
        %v1322 = vsub.f32 %v734, %v1244
        %v1323 = vsub.f32 %v738, %v1207
        %v1324 = vsub.f32 %v740, %v1244
        %v1325 = vsub.f32 %v742, %v1207
        %v1326 = vsub.f32 %v744, %v1244
        %v1327 = vsub.f32 %v748, %v1207
        %v1328 = vsub.f32 %v750, %v1244
        %v1329 = vsub.f32 %v752, %v1207
        %v1330 = vsub.f32 %v754, %v1244
        %v1331 = vsub.f32 %v758, %v1207
        %v1332 = vsub.f32 %v760, %v1244
        %v1333 = vsub.f32 %v762, %v1207
        %v1334 = vsub.f32 %v764, %v1244
        %v1335 = vsub.f32 %v768, %v1207
        %v1336 = vsub.f32 %v770, %v1244
        %v1337 = vsub.f32 %v772, %v1207
        %v1338 = vsub.f32 %v774, %v1244
        %v1339 = vsub.f32 %v778, %v1207
        %v1340 = vsub.f32 %v780, %v1244
        %v1341 = vsub.f32 %v782, %v1207
        %v1342 = vsub.f32 %v784, %v1244
        %v1343 = vsub.f32 %v788, %v1207
        %v1344 = vsub.f32 %v790, %v1244
        %v1345 = vsub.f32 %v792, %v1207
        %v1346 = vsub.f32 %v794, %v1244
        %v1347 = vsub.f32 %v798, %v1207
        %v1348 = vsub.f32 %v800, %v1244
        %v1349 = vsub.f32 %v802, %v1207
        %v1350 = vsub.f32 %v804, %v1244
        %v1351 = vsub.f32 %v808, %v1207
        %v1352 = vsub.f32 %v810, %v1244
        %v1353 = vsub.f32 %v812, %v1207
        %v1354 = vsub.f32 %v814, %v1244
        %v1355 = vsub.f32 %v818, %v1207
        %v1356 = vsub.f32 %v820, %v1244
        %v1357 = vsub.f32 %v822, %v1207
        %v1358 = vsub.f32 %v824, %v1244
        %v1359 = vsub.f32 %v828, %v1207
        %v1360 = vsub.f32 %v830, %v1244
        %v1361 = vsub.f32 %v832, %v1207
        %v1362 = vsub.f32 %v834, %v1244
        %v1363 = vsub.f32 %v838, %v1207
        %v1364 = vsub.f32 %v840, %v1244
        %v1365 = vsub.f32 %v842, %v1207
        %v1366 = vsub.f32 %v844, %v1244
        %v1367 = vsub.f32 %v848, %v1207
        %v1368 = vsub.f32 %v850, %v1244
        %v1369 = vsub.f32 %v852, %v1207
        %v1370 = vsub.f32 %v854, %v1244
        %v1371 = vsub.f32 %v858, %v1207
        %v1372 = vsub.f32 %v860, %v1244
        %v1373 = vsub.f32 %v862, %v1207
        %v1374 = vsub.f32 %v864, %v1244
        %v1375 = vsub.f32 %v868, %v1207
        %v1376 = vsub.f32 %v870, %v1244
        %v1377 = vsub.f32 %v872, %v1207
        %v1378 = vsub.f32 %v874, %v1244
        %v1379 = vsub.f32 %v878, %v1207
        %v1380 = vsub.f32 %v880, %v1244
        %v1381 = vsub.f32 %v882, %v1207
        %v1382 = vsub.f32 %v884, %v1244
        %v1383 = vsub.f32 %v1013, %v1281
        %v1384 = vsub.f32 %v1015, %v1318
        %v1385 = vsub.f32 %v1017, %v1281
        %v1386 = vsub.f32 %v1019, %v1318
        %v1387 = vsub.f32 %v1023, %v1281
        %v1388 = vsub.f32 %v1025, %v1318
        %v1389 = vsub.f32 %v1027, %v1281
        %v1390 = vsub.f32 %v1029, %v1318
        %v1391 = vsub.f32 %v1033, %v1281
        %v1392 = vsub.f32 %v1035, %v1318
        %v1393 = vsub.f32 %v1037, %v1281
        %v1394 = vsub.f32 %v1039, %v1318
        %v1395 = vsub.f32 %v1043, %v1281
        %v1396 = vsub.f32 %v1045, %v1318
        %v1397 = vsub.f32 %v1047, %v1281
        %v1398 = vsub.f32 %v1049, %v1318
        %v1399 = vsub.f32 %v1053, %v1281
        %v1400 = vsub.f32 %v1055, %v1318
        %v1401 = vsub.f32 %v1057, %v1281
        %v1402 = vsub.f32 %v1059, %v1318
        %v1403 = vsub.f32 %v1063, %v1281
        %v1404 = vsub.f32 %v1065, %v1318
        %v1405 = vsub.f32 %v1067, %v1281
        %v1406 = vsub.f32 %v1069, %v1318
        %v1407 = vsub.f32 %v1073, %v1281
        %v1408 = vsub.f32 %v1075, %v1318
        %v1409 = vsub.f32 %v1077, %v1281
        %v1410 = vsub.f32 %v1079, %v1318
        %v1411 = vsub.f32 %v1083, %v1281
        %v1412 = vsub.f32 %v1085, %v1318
        %v1413 = vsub.f32 %v1087, %v1281
        %v1414 = vsub.f32 %v1089, %v1318
        %v1415 = vsub.f32 %v1093, %v1281
        %v1416 = vsub.f32 %v1095, %v1318
        %v1417 = vsub.f32 %v1097, %v1281
        %v1418 = vsub.f32 %v1099, %v1318
        %v1419 = vsub.f32 %v1103, %v1281
        %v1420 = vsub.f32 %v1105, %v1318
        %v1421 = vsub.f32 %v1107, %v1281
        %v1422 = vsub.f32 %v1109, %v1318
        %v1423 = vsub.f32 %v1113, %v1281
        %v1424 = vsub.f32 %v1115, %v1318
        %v1425 = vsub.f32 %v1117, %v1281
        %v1426 = vsub.f32 %v1119, %v1318
        %v1427 = vsub.f32 %v1123, %v1281
        %v1428 = vsub.f32 %v1125, %v1318
        %v1429 = vsub.f32 %v1127, %v1281
        %v1430 = vsub.f32 %v1129, %v1318
        %v1431 = vsub.f32 %v1133, %v1281
        %v1432 = vsub.f32 %v1135, %v1318
        %v1433 = vsub.f32 %v1137, %v1281
        %v1434 = vsub.f32 %v1139, %v1318
        %v1435 = vsub.f32 %v1143, %v1281
        %v1436 = vsub.f32 %v1145, %v1318
        %v1437 = vsub.f32 %v1147, %v1281
        %v1438 = vsub.f32 %v1149, %v1318
        %v1439 = vsub.f32 %v1153, %v1281
        %v1440 = vsub.f32 %v1155, %v1318
        %v1441 = vsub.f32 %v1157, %v1281
        %v1442 = vsub.f32 %v1159, %v1318
        %v1443 = vsub.f32 %v1163, %v1281
        %v1444 = vsub.f32 %v1165, %v1318
        %v1445 = vsub.f32 %v1167, %v1281
        %v1446 = vsub.f32 %v1169, %v1318
        %v1447 = vmul.f32 %v1319, 1.442695
        %v1448 = vpow.pop %v1447
        %v1449 = vmul.f32 %v1320, 1.442695
        %v1450 = vpow.pop %v1449
        %v1451 = vmul.f32 %v1321, 1.442695
        %v1452 = vpow.pop %v1451
        %v1453 = vmul.f32 %v1322, 1.442695
        %v1454 = vpow.pop %v1453
        %v1455 = vmul.f32 %v1323, 1.442695
        %v1456 = vpow.pop %v1455
        %v1457 = vmul.f32 %v1324, 1.442695
        %v1458 = vpow.pop %v1457
        %v1459 = vmul.f32 %v1325, 1.442695
        %v1460 = vpow.pop %v1459
        %v1461 = vmul.f32 %v1326, 1.442695
        %v1462 = vpow.pop %v1461
        %v1463 = vmul.f32 %v1327, 1.442695
        %v1464 = vpow.pop %v1463
        %v1465 = vmul.f32 %v1328, 1.442695
        %v1466 = vpow.pop %v1465
        %v1467 = vmul.f32 %v1329, 1.442695
        %v1468 = vpow.pop %v1467
        %v1469 = vmul.f32 %v1330, 1.442695
        %v1470 = vpow.pop %v1469
        %v1471 = vmul.f32 %v1331, 1.442695
        %v1472 = vpow.pop %v1471
        %v1473 = vmul.f32 %v1332, 1.442695
        %v1474 = vpow.pop %v1473
        %v1475 = vmul.f32 %v1333, 1.442695
        %v1476 = vpow.pop %v1475
        %v1477 = vmul.f32 %v1334, 1.442695
        %v1478 = vpow.pop %v1477
        %v1479 = vmul.f32 %v1335, 1.442695
        %v1480 = vpow.pop %v1479
        %v1481 = vmul.f32 %v1336, 1.442695
        %v1482 = vpow.pop %v1481
        %v1483 = vmul.f32 %v1337, 1.442695
        %v1484 = vpow.pop %v1483
        %v1485 = vmul.f32 %v1338, 1.442695
        %v1486 = vpow.pop %v1485
        %v1487 = vmul.f32 %v1339, 1.442695
        %v1488 = vpow.pop %v1487
        %v1489 = vmul.f32 %v1340, 1.442695
        %v1490 = vpow.pop %v1489
        %v1491 = vmul.f32 %v1341, 1.442695
        %v1492 = vpow.pop %v1491
        %v1493 = vmul.f32 %v1342, 1.442695
        %v1494 = vpow.pop %v1493
        %v1495 = vmul.f32 %v1343, 1.442695
        %v1496 = vpow.pop %v1495
        %v1497 = vmul.f32 %v1344, 1.442695
        %v1498 = vpow.pop %v1497
        %v1499 = vmul.f32 %v1345, 1.442695
        %v1500 = vpow.pop %v1499
        %v1501 = vmul.f32 %v1346, 1.442695
        %v1502 = vpow.pop %v1501
        %v1503 = vmul.f32 %v1347, 1.442695
        %v1504 = vpow.pop %v1503
        %v1505 = vmul.f32 %v1348, 1.442695
        %v1506 = vpow.pop %v1505
        %v1507 = vmul.f32 %v1349, 1.442695
        %v1508 = vpow.pop %v1507
        %v1509 = vmul.f32 %v1350, 1.442695
        %v1510 = vpow.pop %v1509
        %v1511 = vmul.f32 %v1351, 1.442695
        %v1512 = vpow.pop %v1511
        %v1513 = vmul.f32 %v1352, 1.442695
        %v1514 = vpow.pop %v1513
        %v1515 = vmul.f32 %v1353, 1.442695
        %v1516 = vpow.pop %v1515
        %v1517 = vmul.f32 %v1354, 1.442695
        %v1518 = vpow.pop %v1517
        %v1519 = vmul.f32 %v1355, 1.442695
        %v1520 = vpow.pop %v1519
        %v1521 = vmul.f32 %v1356, 1.442695
        %v1522 = vpow.pop %v1521
        %v1523 = vmul.f32 %v1357, 1.442695
        %v1524 = vpow.pop %v1523
        %v1525 = vmul.f32 %v1358, 1.442695
        %v1526 = vpow.pop %v1525
        %v1527 = vmul.f32 %v1359, 1.442695
        %v1528 = vpow.pop %v1527
        %v1529 = vmul.f32 %v1360, 1.442695
        %v1530 = vpow.pop %v1529
        %v1531 = vmul.f32 %v1361, 1.442695
        %v1532 = vpow.pop %v1531
        %v1533 = vmul.f32 %v1362, 1.442695
        %v1534 = vpow.pop %v1533
        %v1535 = vmul.f32 %v1363, 1.442695
        %v1536 = vpow.pop %v1535
        %v1537 = vmul.f32 %v1364, 1.442695
        %v1538 = vpow.pop %v1537
        %v1539 = vmul.f32 %v1365, 1.442695
        %v1540 = vpow.pop %v1539
        %v1541 = vmul.f32 %v1366, 1.442695
        %v1542 = vpow.pop %v1541
        %v1543 = vmul.f32 %v1367, 1.442695
        %v1544 = vpow.pop %v1543
        %v1545 = vmul.f32 %v1368, 1.442695
        %v1546 = vpow.pop %v1545
        %v1547 = vmul.f32 %v1369, 1.442695
        %v1548 = vpow.pop %v1547
        %v1549 = vmul.f32 %v1370, 1.442695
        %v1550 = vpow.pop %v1549
        %v1551 = vmul.f32 %v1371, 1.442695
        %v1552 = vpow.pop %v1551
        %v1553 = vmul.f32 %v1372, 1.442695
        %v1554 = vpow.pop %v1553
        %v1555 = vmul.f32 %v1373, 1.442695
        %v1556 = vpow.pop %v1555
        %v1557 = vmul.f32 %v1374, 1.442695
        %v1558 = vpow.pop %v1557
        %v1559 = vmul.f32 %v1375, 1.442695
        %v1560 = vpow.pop %v1559
        %v1561 = vmul.f32 %v1376, 1.442695
        %v1562 = vpow.pop %v1561
        %v1563 = vmul.f32 %v1377, 1.442695
        %v1564 = vpow.pop %v1563
        %v1565 = vmul.f32 %v1378, 1.442695
        %v1566 = vpow.pop %v1565
        %v1567 = vmul.f32 %v1379, 1.442695
        %v1568 = vpow.pop %v1567
        %v1569 = vmul.f32 %v1380, 1.442695
        %v1570 = vpow.pop %v1569
        %v1571 = vmul.f32 %v1381, 1.442695
        %v1572 = vpow.pop %v1571
        %v1573 = vmul.f32 %v1382, 1.442695
        %v1574 = vpow.pop %v1573
        %v1575 = vmul.f32 %v1383, 1.442695
        %v1576 = vpow.pop %v1575
        %v1577 = vmul.f32 %v1384, 1.442695
        %v1578 = vpow.pop %v1577
        %v1579 = vmul.f32 %v1385, 1.442695
        %v1580 = vpow.pop %v1579
        %v1581 = vmul.f32 %v1386, 1.442695
        %v1582 = vpow.pop %v1581
        %v1583 = vmul.f32 %v1387, 1.442695
        %v1584 = vpow.pop %v1583
        %v1585 = vmul.f32 %v1388, 1.442695
        %v1586 = vpow.pop %v1585
        %v1587 = vmul.f32 %v1389, 1.442695
        %v1588 = vpow.pop %v1587
        %v1589 = vmul.f32 %v1390, 1.442695
        %v1590 = vpow.pop %v1589
        %v1591 = vmul.f32 %v1391, 1.442695
        %v1592 = vpow.pop %v1591
        %v1593 = vmul.f32 %v1392, 1.442695
        %v1594 = vpow.pop %v1593
        %v1595 = vmul.f32 %v1393, 1.442695
        %v1596 = vpow.pop %v1595
        %v1597 = vmul.f32 %v1394, 1.442695
        %v1598 = vpow.pop %v1597
        %v1599 = vmul.f32 %v1395, 1.442695
        %v1600 = vpow.pop %v1599
        %v1601 = vmul.f32 %v1396, 1.442695
        %v1602 = vpow.pop %v1601
        %v1603 = vmul.f32 %v1397, 1.442695
        %v1604 = vpow.pop %v1603
        %v1605 = vmul.f32 %v1398, 1.442695
        %v1606 = vpow.pop %v1605
        %v1607 = vmul.f32 %v1399, 1.442695
        %v1608 = vpow.pop %v1607
        %v1609 = vmul.f32 %v1400, 1.442695
        %v1610 = vpow.pop %v1609
        %v1611 = vmul.f32 %v1401, 1.442695
        %v1612 = vpow.pop %v1611
        %v1613 = vmul.f32 %v1402, 1.442695
        %v1614 = vpow.pop %v1613
        %v1615 = vmul.f32 %v1403, 1.442695
        %v1616 = vpow.pop %v1615
        %v1617 = vmul.f32 %v1404, 1.442695
        %v1618 = vpow.pop %v1617
        %v1619 = vmul.f32 %v1405, 1.442695
        %v1620 = vpow.pop %v1619
        %v1621 = vmul.f32 %v1406, 1.442695
        %v1622 = vpow.pop %v1621
        %v1623 = vmul.f32 %v1407, 1.442695
        %v1624 = vpow.pop %v1623
        %v1625 = vmul.f32 %v1408, 1.442695
        %v1626 = vpow.pop %v1625
        %v1627 = vmul.f32 %v1409, 1.442695
        %v1628 = vpow.pop %v1627
        %v1629 = vmul.f32 %v1410, 1.442695
        %v1630 = vpow.pop %v1629
        %v1631 = vmul.f32 %v1411, 1.442695
        %v1632 = vpow.pop %v1631
        %v1633 = vmul.f32 %v1412, 1.442695
        %v1634 = vpow.pop %v1633
        %v1635 = vmul.f32 %v1413, 1.442695
        %v1636 = vpow.pop %v1635
        %v1637 = vmul.f32 %v1414, 1.442695
        %v1638 = vpow.pop %v1637
        %v1639 = vmul.f32 %v1415, 1.442695
        %v1640 = vpow.pop %v1639
        %v1641 = vmul.f32 %v1416, 1.442695
        %v1642 = vpow.pop %v1641
        %v1643 = vmul.f32 %v1417, 1.442695
        %v1644 = vpow.pop %v1643
        %v1645 = vmul.f32 %v1418, 1.442695
        %v1646 = vpow.pop %v1645
        %v1647 = vmul.f32 %v1419, 1.442695
        %v1648 = vpow.pop %v1647
        %v1649 = vmul.f32 %v1420, 1.442695
        %v1650 = vpow.pop %v1649
        %v1651 = vmul.f32 %v1421, 1.442695
        %v1652 = vpow.pop %v1651
        %v1653 = vmul.f32 %v1422, 1.442695
        %v1654 = vpow.pop %v1653
        %v1655 = vmul.f32 %v1423, 1.442695
        %v1656 = vpow.pop %v1655
        %v1657 = vmul.f32 %v1424, 1.442695
        %v1658 = vpow.pop %v1657
        %v1659 = vmul.f32 %v1425, 1.442695
        %v1660 = vpow.pop %v1659
        %v1661 = vmul.f32 %v1426, 1.442695
        %v1662 = vpow.pop %v1661
        %v1663 = vmul.f32 %v1427, 1.442695
        %v1664 = vpow.pop %v1663
        %v1665 = vmul.f32 %v1428, 1.442695
        %v1666 = vpow.pop %v1665
        %v1667 = vmul.f32 %v1429, 1.442695
        %v1668 = vpow.pop %v1667
        %v1669 = vmul.f32 %v1430, 1.442695
        %v1670 = vpow.pop %v1669
        %v1671 = vmul.f32 %v1431, 1.442695
        %v1672 = vpow.pop %v1671
        %v1673 = vmul.f32 %v1432, 1.442695
        %v1674 = vpow.pop %v1673
        %v1675 = vmul.f32 %v1433, 1.442695
        %v1676 = vpow.pop %v1675
        %v1677 = vmul.f32 %v1434, 1.442695
        %v1678 = vpow.pop %v1677
        %v1679 = vmul.f32 %v1435, 1.442695
        %v1680 = vpow.pop %v1679
        %v1681 = vmul.f32 %v1436, 1.442695
        %v1682 = vpow.pop %v1681
        %v1683 = vmul.f32 %v1437, 1.442695
        %v1684 = vpow.pop %v1683
        %v1685 = vmul.f32 %v1438, 1.442695
        %v1686 = vpow.pop %v1685
        %v1687 = vmul.f32 %v1439, 1.442695
        %v1688 = vpow.pop %v1687
        %v1689 = vmul.f32 %v1440, 1.442695
        %v1690 = vpow.pop %v1689
        %v1691 = vmul.f32 %v1441, 1.442695
        %v1692 = vpow.pop %v1691
        %v1693 = vmul.f32 %v1442, 1.442695
        %v1694 = vpow.pop %v1693
        %v1695 = vmul.f32 %v1443, 1.442695
        %v1696 = vpow.pop %v1695
        %v1697 = vmul.f32 %v1444, 1.442695
        %v1698 = vpow.pop %v1697
        %v1699 = vmul.f32 %v1445, 1.442695
        %v1700 = vpow.pop %v1699
        %v1701 = vmul.f32 %v1446, 1.442695
        %v1702 = vpow.pop %v1701
        %v1703 = vadd.f32 %v1448, %v1452
        %v1704 = vadd.f32 %v1703, %v1456
        %v1705 = vadd.f32 %v1704, %v1460
        %v1706 = vadd.f32 %v1705, %v1464
        %v1707 = vadd.f32 %v1706, %v1468
        %v1708 = vadd.f32 %v1707, %v1472
        %v1709 = vadd.f32 %v1708, %v1476
        %v1710 = vadd.f32 %v1709, %v1480
        %v1711 = vadd.f32 %v1710, %v1484
        %v1712 = vadd.f32 %v1711, %v1488
        %v1713 = vadd.f32 %v1712, %v1492
        %v1714 = vadd.f32 %v1713, %v1496
        %v1715 = vadd.f32 %v1714, %v1500
        %v1716 = vadd.f32 %v1715, %v1504
        %v1717 = vadd.f32 %v1716, %v1508
        %v1718 = vadd.f32 %v1717, %v1512
        %v1719 = vadd.f32 %v1718, %v1516
        %v1720 = vadd.f32 %v1719, %v1520
        %v1721 = vadd.f32 %v1720, %v1524
        %v1722 = vadd.f32 %v1721, %v1528
        %v1723 = vadd.f32 %v1722, %v1532
        %v1724 = vadd.f32 %v1723, %v1536
        %v1725 = vadd.f32 %v1724, %v1540
        %v1726 = vadd.f32 %v1725, %v1544
        %v1727 = vadd.f32 %v1726, %v1548
        %v1728 = vadd.f32 %v1727, %v1552
        %v1729 = vadd.f32 %v1728, %v1556
        %v1730 = vadd.f32 %v1729, %v1560
        %v1731 = vadd.f32 %v1730, %v1564
        %v1732 = vadd.f32 %v1731, %v1568
        %v1733 = vadd.f32 %v1732, %v1572
        %v1734 = vrot.slane %v1733, 4
        %v1735 = vadd.f32 %v1733, %v1734
        %v1736 = vrot.slane %v1735, 2
        %v1737 = vadd.f32 %v1735, %v1736
        %v1738 = vrot.slane %v1737, 1
        %v1739 = vadd.f32 %v1737, %v1738
        %v1740 = vadd.f32 %v1450, %v1454
        %v1741 = vadd.f32 %v1740, %v1458
        %v1742 = vadd.f32 %v1741, %v1462
        %v1743 = vadd.f32 %v1742, %v1466
        %v1744 = vadd.f32 %v1743, %v1470
        %v1745 = vadd.f32 %v1744, %v1474
        %v1746 = vadd.f32 %v1745, %v1478
        %v1747 = vadd.f32 %v1746, %v1482
        %v1748 = vadd.f32 %v1747, %v1486
        %v1749 = vadd.f32 %v1748, %v1490
        %v1750 = vadd.f32 %v1749, %v1494
        %v1751 = vadd.f32 %v1750, %v1498
        %v1752 = vadd.f32 %v1751, %v1502
        %v1753 = vadd.f32 %v1752, %v1506
        %v1754 = vadd.f32 %v1753, %v1510
        %v1755 = vadd.f32 %v1754, %v1514
        %v1756 = vadd.f32 %v1755, %v1518
        %v1757 = vadd.f32 %v1756, %v1522
        %v1758 = vadd.f32 %v1757, %v1526
        %v1759 = vadd.f32 %v1758, %v1530
        %v1760 = vadd.f32 %v1759, %v1534
        %v1761 = vadd.f32 %v1760, %v1538
        %v1762 = vadd.f32 %v1761, %v1542
        %v1763 = vadd.f32 %v1762, %v1546
        %v1764 = vadd.f32 %v1763, %v1550
        %v1765 = vadd.f32 %v1764, %v1554
        %v1766 = vadd.f32 %v1765, %v1558
        %v1767 = vadd.f32 %v1766, %v1562
        %v1768 = vadd.f32 %v1767, %v1566
        %v1769 = vadd.f32 %v1768, %v1570
        %v1770 = vadd.f32 %v1769, %v1574
        %v1771 = vrot.slane %v1770, 4
        %v1772 = vadd.f32 %v1770, %v1771
        %v1773 = vrot.slane %v1772, 2
        %v1774 = vadd.f32 %v1772, %v1773
        %v1775 = vrot.slane %v1774, 1
        %v1776 = vadd.f32 %v1774, %v1775
        %v1777 = vadd.f32 %v1576, %v1580
        %v1778 = vadd.f32 %v1777, %v1584
        %v1779 = vadd.f32 %v1778, %v1588
        %v1780 = vadd.f32 %v1779, %v1592
        %v1781 = vadd.f32 %v1780, %v1596
        %v1782 = vadd.f32 %v1781, %v1600
        %v1783 = vadd.f32 %v1782, %v1604
        %v1784 = vadd.f32 %v1783, %v1608
        %v1785 = vadd.f32 %v1784, %v1612
        %v1786 = vadd.f32 %v1785, %v1616
        %v1787 = vadd.f32 %v1786, %v1620
        %v1788 = vadd.f32 %v1787, %v1624
        %v1789 = vadd.f32 %v1788, %v1628
        %v1790 = vadd.f32 %v1789, %v1632
        %v1791 = vadd.f32 %v1790, %v1636
        %v1792 = vadd.f32 %v1791, %v1640
        %v1793 = vadd.f32 %v1792, %v1644
        %v1794 = vadd.f32 %v1793, %v1648
        %v1795 = vadd.f32 %v1794, %v1652
        %v1796 = vadd.f32 %v1795, %v1656
        %v1797 = vadd.f32 %v1796, %v1660
        %v1798 = vadd.f32 %v1797, %v1664
        %v1799 = vadd.f32 %v1798, %v1668
        %v1800 = vadd.f32 %v1799, %v1672
        %v1801 = vadd.f32 %v1800, %v1676
        %v1802 = vadd.f32 %v1801, %v1680
        %v1803 = vadd.f32 %v1802, %v1684
        %v1804 = vadd.f32 %v1803, %v1688
        %v1805 = vadd.f32 %v1804, %v1692
        %v1806 = vadd.f32 %v1805, %v1696
        %v1807 = vadd.f32 %v1806, %v1700
        %v1808 = vrot.slane %v1807, 4
        %v1809 = vadd.f32 %v1807, %v1808
        %v1810 = vrot.slane %v1809, 2
        %v1811 = vadd.f32 %v1809, %v1810
        %v1812 = vrot.slane %v1811, 1
        %v1813 = vadd.f32 %v1811, %v1812
        %v1814 = vadd.f32 %v1578, %v1582
        %v1815 = vadd.f32 %v1814, %v1586
        %v1816 = vadd.f32 %v1815, %v1590
        %v1817 = vadd.f32 %v1816, %v1594
        %v1818 = vadd.f32 %v1817, %v1598
        %v1819 = vadd.f32 %v1818, %v1602
        %v1820 = vadd.f32 %v1819, %v1606
        %v1821 = vadd.f32 %v1820, %v1610
        %v1822 = vadd.f32 %v1821, %v1614
        %v1823 = vadd.f32 %v1822, %v1618
        %v1824 = vadd.f32 %v1823, %v1622
        %v1825 = vadd.f32 %v1824, %v1626
        %v1826 = vadd.f32 %v1825, %v1630
        %v1827 = vadd.f32 %v1826, %v1634
        %v1828 = vadd.f32 %v1827, %v1638
        %v1829 = vadd.f32 %v1828, %v1642
        %v1830 = vadd.f32 %v1829, %v1646
        %v1831 = vadd.f32 %v1830, %v1650
        %v1832 = vadd.f32 %v1831, %v1654
        %v1833 = vadd.f32 %v1832, %v1658
        %v1834 = vadd.f32 %v1833, %v1662
        %v1835 = vadd.f32 %v1834, %v1666
        %v1836 = vadd.f32 %v1835, %v1670
        %v1837 = vadd.f32 %v1836, %v1674
        %v1838 = vadd.f32 %v1837, %v1678
        %v1839 = vadd.f32 %v1838, %v1682
        %v1840 = vadd.f32 %v1839, %v1686
        %v1841 = vadd.f32 %v1840, %v1690
        %v1842 = vadd.f32 %v1841, %v1694
        %v1843 = vadd.f32 %v1842, %v1698
        %v1844 = vadd.f32 %v1843, %v1702
        %v1845 = vrot.slane %v1844, 4
        %v1846 = vadd.f32 %v1844, %v1845
        %v1847 = vrot.slane %v1846, 2
        %v1848 = vadd.f32 %v1846, %v1847
        %v1849 = vrot.slane %v1848, 1
        %v1850 = vadd.f32 %v1848, %v1849
        %v1851 = vpack.c.bf16 %v1452, %v1448
        %v1852 = vpack.c.bf16 %v1454, %v1450
        %v1853 = vpack.c.bf16 %v1460, %v1456
        %v1854 = vpack.c.bf16 %v1462, %v1458
        %v1855 = vpack.c.bf16 %v1468, %v1464
        %v1856 = vpack.c.bf16 %v1470, %v1466
        %v1857 = vpack.c.bf16 %v1476, %v1472
        %v1858 = vpack.c.bf16 %v1478, %v1474
        %v1859 = vpack.c.bf16 %v1484, %v1480
        %v1860 = vpack.c.bf16 %v1486, %v1482
        %v1861 = vpack.c.bf16 %v1492, %v1488
        %v1862 = vpack.c.bf16 %v1494, %v1490
        %v1863 = vpack.c.bf16 %v1500, %v1496
        %v1864 = vpack.c.bf16 %v1502, %v1498
        %v1865 = vpack.c.bf16 %v1508, %v1504
        %v1866 = vpack.c.bf16 %v1510, %v1506
        %v1867 = vpack.c.bf16 %v1516, %v1512
        %v1868 = vpack.c.bf16 %v1518, %v1514
        %v1869 = vpack.c.bf16 %v1524, %v1520
        %v1870 = vpack.c.bf16 %v1526, %v1522
        %v1871 = vpack.c.bf16 %v1532, %v1528
        %v1872 = vpack.c.bf16 %v1534, %v1530
        %v1873 = vpack.c.bf16 %v1540, %v1536
        %v1874 = vpack.c.bf16 %v1542, %v1538
        %v1875 = vpack.c.bf16 %v1548, %v1544
        %v1876 = vpack.c.bf16 %v1550, %v1546
        %v1877 = vpack.c.bf16 %v1556, %v1552
        %v1878 = vpack.c.bf16 %v1558, %v1554
        %v1879 = vpack.c.bf16 %v1564, %v1560
        %v1880 = vpack.c.bf16 %v1566, %v1562
        %v1881 = vpack.c.bf16 %v1572, %v1568
        %v1882 = vpack.c.bf16 %v1574, %v1570
        %v1883 = vpack.c.bf16 %v1580, %v1576
        %v1884 = vpack.c.bf16 %v1582, %v1578
        %v1885 = vpack.c.bf16 %v1588, %v1584
        %v1886 = vpack.c.bf16 %v1590, %v1586
        %v1887 = vpack.c.bf16 %v1596, %v1592
        %v1888 = vpack.c.bf16 %v1598, %v1594
        %v1889 = vpack.c.bf16 %v1604, %v1600
        %v1890 = vpack.c.bf16 %v1606, %v1602
        %v1891 = vpack.c.bf16 %v1612, %v1608
        %v1892 = vpack.c.bf16 %v1614, %v1610
        %v1893 = vpack.c.bf16 %v1620, %v1616
        %v1894 = vpack.c.bf16 %v1622, %v1618
        %v1895 = vpack.c.bf16 %v1628, %v1624
        %v1896 = vpack.c.bf16 %v1630, %v1626
        %v1897 = vpack.c.bf16 %v1636, %v1632
        %v1898 = vpack.c.bf16 %v1638, %v1634
        %v1899 = vpack.c.bf16 %v1644, %v1640
        %v1900 = vpack.c.bf16 %v1646, %v1642
        %v1901 = vpack.c.bf16 %v1652, %v1648
        %v1902 = vpack.c.bf16 %v1654, %v1650
        %v1903 = vpack.c.bf16 %v1660, %v1656
        %v1904 = vpack.c.bf16 %v1662, %v1658
        %v1905 = vpack.c.bf16 %v1668, %v1664
        %v1906 = vpack.c.bf16 %v1670, %v1666
        %v1907 = vpack.c.bf16 %v1676, %v1672
        %v1908 = vpack.c.bf16 %v1678, %v1674
        %v1909 = vpack.c.bf16 %v1684, %v1680
        %v1910 = vpack.c.bf16 %v1686, %v1682
        %v1911 = vpack.c.bf16 %v1692, %v1688
        %v1912 = vpack.c.bf16 %v1694, %v1690
        %v1913 = vpack.c.bf16 %v1700, %v1696
        %v1914 = vpack.c.bf16 %v1702, %v1698
        %v1915 = vpack.c.b16 %v595, %v595
        %v1916 = vpack.c.b16 %v596, %v596
        %1919 = vmatprep.subr.bf16.mxu0 %v1866
        %1920 = vmatpush1.bf16.msra.mxu0 %v1865
        %1921 = vmatprep.subr.bf16.mxu0 %v1864
        %1922 = vmatpush1.bf16.msra.mxu0 %v1863
        %1923 = vmatprep.subr.bf16.mxu0 %v1862
        %1924 = vmatpush1.bf16.msra.mxu0 %v1861
        %1925 = vmatprep.subr.bf16.mxu0 %v1860
        %1926 = vmatpush1.bf16.msra.mxu0 %v1859
        %1927 = vmatprep.subr.bf16.mxu0 %v1858
        %1928 = vmatpush1.bf16.msra.mxu0 %v1857
        %1929 = vmatprep.subr.bf16.mxu0 %v1856
        %1930 = vmatpush1.bf16.msra.mxu0 %v1855
        %1931 = vmatprep.subr.bf16.mxu0 %v1854
        %1932 = vmatpush1.bf16.msra.mxu0 %v1853
        %1933 = vmatprep.subr.bf16.mxu0 %v1852
        %1934 = vmatpush1.bf16.msra.mxu0 %v1851
        %1935 = vmatprep.subr.bf16.mxu0 %v1882
        %1936 = vmatpush2.bf16.msra.mxu0 %v1881
        %1937 = vmatprep.subr.bf16.mxu0 %v1880
        %1938 = vmatpush2.bf16.msra.mxu0 %v1879
        %1939 = vmatprep.subr.bf16.mxu0 %v1878
        %1940 = vmatpush2.bf16.msra.mxu0 %v1877
        %1941 = vmatprep.subr.bf16.mxu0 %v1876
        %1942 = vmatpush2.bf16.msra.mxu0 %v1875
        %1943 = vmatprep.subr.bf16.mxu0 %v1874
        %1944 = vmatpush2.bf16.msra.mxu0 %v1873
        %1945 = vmatprep.subr.bf16.mxu0 %v1872
        %1946 = vmatpush2.bf16.msra.mxu0 %v1871
        %1947 = vmatprep.subr.bf16.mxu0 %v1870
        %1948 = vmatpush2.bf16.msra.mxu0 %v1869
        %1949 = vmatprep.subr.bf16.mxu0 %v1868
        %1950 = vmatpush2.bf16.msra.mxu0 %v1867
        %1951 = vmatprep.mubr.bf16.mxu0 %v1916
        %1952 = vmatmul.mubr.bf16.gmra.mxu0 %v1915
        %v1953 = vpop.f32.mrf.mxu0
        %v1954 = vadd.f32 0.0, %v1953
        %v1955 = vpop.f32.mrf.mxu0
        %v1956 = vadd.f32 0.0, %v1955
        %v1957 = vpop.f32.mrf.mxu0
        %v1958 = vpop.f32.mrf.mxu0
        %1959 = vdwg.mxu0
        %v1960 = vpack.c.b16 %v597, %v597
        %v1961 = vpack.c.b16 %v598, %v598
        %1964 = vmatprep.subr.bf16.mxu0 %v1898
        %1965 = vmatpush1.bf16.msra.mxu0 %v1897
        %1966 = vmatprep.subr.bf16.mxu0 %v1896
        %1967 = vmatpush1.bf16.msra.mxu0 %v1895
        %1968 = vmatprep.subr.bf16.mxu0 %v1894
        %1969 = vmatpush1.bf16.msra.mxu0 %v1893
        %1970 = vmatprep.subr.bf16.mxu0 %v1892
        %1971 = vmatpush1.bf16.msra.mxu0 %v1891
        %1972 = vmatprep.subr.bf16.mxu0 %v1890
        %1973 = vmatpush1.bf16.msra.mxu0 %v1889
        %1974 = vmatprep.subr.bf16.mxu0 %v1888
        %1975 = vmatpush1.bf16.msra.mxu0 %v1887
        %1976 = vmatprep.subr.bf16.mxu0 %v1886
        %1977 = vmatpush1.bf16.msra.mxu0 %v1885
        %1978 = vmatprep.subr.bf16.mxu0 %v1884
        %1979 = vmatpush1.bf16.msra.mxu0 %v1883
        %1980 = vmatprep.subr.bf16.mxu0 %v1914
        %1981 = vmatpush2.bf16.msra.mxu0 %v1913
        %1982 = vmatprep.subr.bf16.mxu0 %v1912
        %1983 = vmatpush2.bf16.msra.mxu0 %v1911
        %1984 = vmatprep.subr.bf16.mxu0 %v1910
        %1985 = vmatpush2.bf16.msra.mxu0 %v1909
        %1986 = vmatprep.subr.bf16.mxu0 %v1908
        %1987 = vmatpush2.bf16.msra.mxu0 %v1907
        %1988 = vmatprep.subr.bf16.mxu0 %v1906
        %1989 = vmatpush2.bf16.msra.mxu0 %v1905
        %1990 = vmatprep.subr.bf16.mxu0 %v1904
        %1991 = vmatpush2.bf16.msra.mxu0 %v1903
        %1992 = vmatprep.subr.bf16.mxu0 %v1902
        %1993 = vmatpush2.bf16.msra.mxu0 %v1901
        %1994 = vmatprep.subr.bf16.mxu0 %v1900
        %1995 = vmatpush2.bf16.msra.mxu0 %v1899
        %1996 = vmatprep.mubr.bf16.mxu0 %v1961
        %1997 = vmatmul.mubr.bf16.gmra.mxu0 %v1960
        %v1998 = vpop.f32.mrf.mxu0
        %v1999 = vadd.f32 0.0, %v1998
        %v2000 = vpop.f32.mrf.mxu0
        %v2001 = vadd.f32 0.0, %v2000
        %v2002 = vpop.f32.mrf.mxu0
        %v2003 = vpop.f32.mrf.mxu0
        %2004 = vdwg.mxu0
        %v2005 = vrcp.pop %v1739
        %v2006 = vrcp.pop %v1776
        %v2007 = vrcp.pop %v1813
        %v2008 = vrcp.pop %v1850
        %v2009 = vmul.f32 %v1954, %v2005
        %v2010 = vmul.f32 %v1956, %v2006
        %v2011 = vmul.f32 %v1999, %v2007
        %v2012 = vmul.f32 %v2001, %v2008
        %v2013 = vpack.c.bf16 %v2009, %v2009
        %v2014 = vpack.c.bf16 %v2010, %v2010
        %v2015 = vpack.c.bf16 %v2011, %v2011
        %v2016 = vpack.c.bf16 %v2012, %v2012
        %v2017 = vld [vmem:[%s6] sm:$0x3]
        %v2022 = vunpack.c.l.b16 %v2013
        %v2023 = vunpack.c.l.b16 %v2014
        %v2024 = vunpack.c.l.b16 %v2015
        %v2025 = vunpack.c.l.b16 %v2016
        %v2026 = vld [vmem:[%s7] sm:$0xf]
        %2028 = vset.pattern.permute.xlu0 0
        %2029 = vperm.xlu0 %2028, %v2026
        %v2030 = vpop.permute.xlu0 %2029
        %v2032 = vpack.c.b16 %v2024, %v2022
        %v2033 = vpack.c.b16 %v2025, %v2023
        %vm2036 = vcmask 130048
        %v2038 = vsel %vm2036, %v2017, 0
        %2040 = vmatprep.subr.bf16.mxu0 0
        %2041 = vmatpush1.bf16.msra.mxu0 0
        %2042 = vmatprep.subr.bf16.mxu0 0
        %2043 = vmatpush1.bf16.msra.mxu0 0
        %2044 = vmatprep.subr.bf16.mxu0 0
        %2045 = vmatpush1.bf16.msra.mxu0 0
        %2046 = vmatprep.subr.bf16.mxu0 0
        %2047 = vmatpush1.bf16.msra.mxu0 0
        %2048 = vmatprep.subr.bf16.mxu0 0
        %2049 = vmatpush1.bf16.msra.mxu0 0
        %2050 = vmatprep.subr.bf16.mxu0 0
        %2051 = vmatpush1.bf16.msra.mxu0 0
        %2052 = vmatprep.subr.bf16.mxu0 0
        %2053 = vmatpush1.bf16.msra.mxu0 0
        %2054 = vmatprep.subr.bf16.mxu0 %v2033
        %2055 = vmatpush1.bf16.msra.mxu0 %v2032
        %2056 = vmatprep.subr.bf16.mxu0 0
        %2057 = vmatpush2.bf16.msra.mxu0 0
        %2058 = vmatprep.subr.bf16.mxu0 0
        %2059 = vmatpush2.bf16.msra.mxu0 0
        %2060 = vmatprep.subr.bf16.mxu0 0
        %2061 = vmatpush2.bf16.msra.mxu0 0
        %2062 = vmatprep.subr.bf16.mxu0 0
        %2063 = vmatpush2.bf16.msra.mxu0 0
        %2064 = vmatprep.subr.bf16.mxu0 0
        %2065 = vmatpush2.bf16.msra.mxu0 0
        %2066 = vmatprep.subr.bf16.mxu0 0
        %2067 = vmatpush2.bf16.msra.mxu0 0
        %2068 = vmatprep.subr.bf16.mxu0 0
        %2069 = vmatpush2.bf16.msra.mxu0 0
        %2070 = vmatprep.subr.bf16.mxu0 0
        %2071 = vmatpush2.bf16.msra.mxu0 0
        %2072 = vmatprep.mubr.bf16.mxu0 0
        %2073 = vmatmul.mubr.bf16.gmra.mxu0 %v2038
        %v2074 = vpop.f32.mrf.mxu0
        %v2075 = vadd.f32 %v2030, %v2074
        %v2076 = vpop.f32.mrf.mxu0
        %v2077 = vadd.f32 %v2030, %v2076
        %v2078 = vpop.f32.mrf.mxu0
        %v2079 = vpop.f32.mrf.mxu0
        %2080 = vdwg.mxu0
        %v2081 = vpack.c.bf16 %v2075, %v2075
        %v2082 = vpack.c.bf16 %v2077, %v2077
        %v2085 = vcombine.low %v2081, %v2082
        %v2087 = vunpack.c.l.s4 1983009808
        %v2088 = vunpack.c.0.s8 %v2087
        %v2089 = vlaneseq
        %v2090 = vshrl.u32 %v2089, 7
        %v2091 = vsub.s32 %v2088, %v2090
        %v2092 = vrot.slane %v2085, %v2091
        %2094 = vst [vmem:[%s356] sm:$0xf] %v2092
        %s2095 = sand.u32 %s233, 1
        %s2096 = scalar_lea.sflag [#allocation3], %s2095
        %s2097 = sand.u32 %s233, 1
        %s2098 = smul.addr %s2097, 4
        %s2099 = scalar_lea.vmem [#allocation2], %s2098
        // Predicated region
        $region53: #{tpu_custom_call.1} parent=51 // pred_check
          %p2100 = pneg %p243
        $region54: #{tpu_custom_call.1} parent=51 // pred_check_branch
          %2102 = sbr.rel (%p2100) target = $region56
        $region55: #{tpu_custom_call.1} parent=51 // pred_region
          %s2103 = smul.u32 2, %s28
          %s2105 = ssub.s32 64, 64
          %2106 = vsyncadd %s2096, %s2105
          %s2107 = smul.addr %s27, 2
          %s2108 = sadd.s32 %s2103, %s2107
          %s2109 = smul.addr %s2108, 32
          %s2110 = scalar_lea.hbm %s8, %s2109
          %s2112 = sshll.u32 %s2099, 4
          %s2113 = int_to_ptr.vmem [resolvable:$true] %s2112
          %2115 = dma.vmem_to_hbm [thread:$0]  %s2113, 64, %s2110, %s2096
        $region56: #{tpu_custom_call.1} parent=51 // pred_fallthru
          _
      $region52: #{tpu_custom_call.1} parent=5 // pred_fallthru
        _
      %p2116 = scmp.le.s32.totalorder 2, %s17
      // Predicated region
      $region57: #{tpu_custom_call.1} parent=5 // pred_check
        %p2117 = pneg %p2116
      $region58: #{tpu_custom_call.1} parent=5 // pred_check_branch
        %2119 = sbr.rel (%p2117) target = $region60
      $region59: #{tpu_custom_call.1} parent=5 // pred_region
        %s2120 = ssub.s32 %s17, 2
        // Predicated region
        $region61: #{tpu_custom_call.1} parent=59 // pred_check
          %p2121 = pneg %p249
        $region62: #{tpu_custom_call.1} parent=59 // pred_check_branch
          %2123 = sbr.rel (%p2121) target = $region64
        $region63: #{tpu_custom_call.1} parent=59 // pred_region
          %s2124 = sand.u32 %s234, 1
          %s2125 = scalar_lea.sflag [#allocation3], %s2124
          %s2126 = sand.u32 %s234, 1
          %s2127 = smul.addr %s2126, 4
          %s2128 = scalar_lea.vmem [#allocation2], %s2127
          %2129 = dma.done %s2125, 64
        $region64: #{tpu_custom_call.1} parent=59 // pred_fallthru
          _
      $region60: #{tpu_custom_call.1} parent=5 // pred_fallthru
        _
    $region6: #{tpu_custom_call.1} parent=1 // loop_footer
      %s21 = sadd.s32 1, %s17
    $region7: #{tpu_custom_call.1} parent=1 // loop_footer_branch
      %16 = sbr.rel target = $region3
    $region8: #{tpu_custom_call.1} parent=1 // loop_exit
      _
    %2130 = vsyncpa [#allocation3], 1
    %s2131 = scalar_lea.sflag [#allocation3], 1
    %2132 = vsyncpa %s2131, 1

</llo_original>
